<compile_context>
chip_gen: v5e
topology: v5e:2x2
jax: 0.10.0
libtpu: 0.0.40
codegen_flags: <defaults>
</compile_context>

<pallas_src>
import functools

import jax
import jax.numpy as jnp
from jax.experimental import pallas as pl
from jax.experimental.pallas import tpu as pltpu


def lstm1_kernel(x_ref, wih1_ref, whh1_ref, misc_ref, y_ref, *, h2_dim):
    B, T, _D = x_ref.shape
    H1, G1 = whh1_ref.shape            # (H1, 4*H1)
    H2 = h2_dim
    G2 = 4 * H2

    # ---- hoist all parameter loads out of the recurrence (one vld each) ----
    whh1 = whh1_ref[...]               # (H1, 4*H1) bf16 — serial-path MXU operand
    misc = misc_ref[...]               # (8 + H1, 128) f32 packed parameter slab
    b1 = misc[0:1, :G1]                              # (1, 4*H1)
    b2 = misc[1:2, :G2]                              # (1, 4*H2)  (BN1 shift folded)
    wfc = misc[1:2, G2:G2 + H2]                      # (1, H2)    (BN2 scale folded)
    bfc = misc[1:2, G2 + H2:G2 + H2 + 1]             # (1, 1)     (BN2 shift folded)
    whh2 = misc[2:2 + H2, :G2]                       # (H2, 4*H2)
    wih2_pad = misc[8:8 + H1, :]                     # (H1, 128); lanes >= 4*H2 are 0
                                                     #            (BN1 scale folded)

    # ---- hoisted, time-parallel layer-1 input projection (off serial path) -
    proj = [jnp.dot(x_ref[b], wih1_ref[...],
                    preferred_element_type=jnp.float32) + b1
            for b in range(B)]                                   # B x (T, 4*H1)
    # Per-timestep (B, 4*H1) slabs; independent of the recurrent state.
    g1_in = [jnp.concatenate([proj[b][t:t + 1, :] for b in range(B)], axis=0)
             for t in range(T)]

    # ---- pass 1: layer-1 recurrence (serial; one bf16 MXU matmul per step) -
    h1 = jnp.zeros((B, H1), jnp.float32)
    c1 = jnp.zeros((B, H1), jnp.float32)
    a1_ts = []
    for t in range(T):
        g1 = g1_in[t] + jnp.dot(h1.astype(jnp.bfloat16), whh1,
                                preferred_element_type=jnp.float32)
        sg = jax.nn.sigmoid(g1)        # one EUP pass over the whole gate slab
        th = jnp.tanh(g1)              # one EUP pass
        i1 = sg[:, 0 * H1:1 * H1]
        f1 = sg[:, 1 * H1:2 * H1]
        gg1 = th[:, 2 * H1:3 * H1]
        o1 = sg[:, 3 * H1:4 * H1]
        c1 = f1 * c1 + i1 * gg1
        h1 = o1 * jnp.tanh(c1)
        # dropout1 = identity (eval); ReLU; BatchNorm1 folded into wih2/b2.
        a1_ts.append(jnp.maximum(h1, 0.0))

    # ---- batched layer-2 input projection (ONE matmul, off the serial path) -
    a1_all = jnp.concatenate(a1_ts, axis=0)                        # (T*B, H1)
    g2_full = jnp.dot(a1_all, wih2_pad, preferred_element_type=jnp.float32)
    g2_in = g2_full[:, :G2] + b2                                   # (T*B, 4*H2)

    # ---- pass 2: layer-2 recurrence, pure VPU FMAs (H2 == 2) ---------------
    h2 = jnp.zeros((B, H2), jnp.float32)
    c2 = jnp.zeros((B, H2), jnp.float32)
    y_cols = []
    for t in range(T):
        g2 = g2_in[t * B:(t + 1) * B, :]
        for j in range(H2):
            g2 = g2 + h2[:, j:j + 1] * whh2[j:j + 1, :]
        sg2 = jax.nn.sigmoid(g2)
        th2 = jnp.tanh(g2)
        i2 = sg2[:, 0 * H2:1 * H2]
        f2 = sg2[:, 1 * H2:2 * H2]
        gg2 = th2[:, 2 * H2:3 * H2]
        o2 = sg2[:, 3 * H2:4 * H2]
        c2 = f2 * c2 + i2 * gg2
        h2 = o2 * jnp.tanh(c2)
        # dropout2 = identity; BatchNorm2 + Linear(H2, 1) folded into wfc/bfc.
        y_t = bfc
        for j in range(H2):
            y_t = y_t + h2[:, j:j + 1] * wfc[:, j:j + 1]
        y_cols.append(y_t)                                         # (B, 1)

    # Output already in batch-first (B, T) order — no post-kernel transpose.
    y_ref[...] = jnp.concatenate(y_cols, axis=1).astype(y_ref.dtype)


@functools.partial(jax.jit, static_argnames=("h2_dim",))
def lstm1_forward(x, kp, *, h2_dim):
    """x: (B, T, D) batch-first, like nn.LSTM(batch_first=True). Returns (B, T, 1)."""
    B, T, _ = x.shape
    vmem = pl.BlockSpec(memory_space=pltpu.MemorySpace.VMEM)
    y = pl.pallas_call(
        functools.partial(lstm1_kernel, h2_dim=h2_dim),
        out_shape=jax.ShapeDtypeStruct((B, T), jnp.float32),
        in_specs=[vmem] * 4,
        out_specs=vmem,
    )(x, kp["wih1"], kp["whh1"], kp["misc"])
    return y[..., None].astype(x.dtype)                            # (B, T, 1)


def prepare_kernel_params(p):
    """Fold the eval-mode BatchNorm affines into adjacent weights, pack the
    small parameters into one (8,128)-aligned f32 slab, and cast the
    serial-path MXU operand (W_hh1) to bf16.  Run once, outside jit."""
    H1 = p["whh1"].shape[0]
    H2 = p["whh2"].shape[0]
    G1, G2 = 4 * H1, 4 * H2
    assert G1 <= 128 and G2 + H2 + 1 <= 128 and 2 + H2 <= 8

    # BatchNorm1 (after ReLU) folded into the layer-2 input projection.
    wih2_f = p["bn1_scale"][0][:, None] * p["wih2"]               # (H1, 4*H2)
    b2_f = p["b2"] + p["bn1_shift"] @ p["wih2"]                   # (1, 4*H2)
    # BatchNorm2 + fc1 folded together.
    wfc_f = p["bn2_scale"][0][:, None] * p["wfc"]                 # (H2, 1)
    bfc_f = p["bfc"] + p["bn2_shift"] @ p["wfc"]                  # (1, 1)

    misc = jnp.zeros((8 + H1, 128), jnp.float32)
    misc = misc.at[0, :G1].set(p["b1"][0])
    misc = misc.at[1, :G2].set(b2_f[0])
    misc = misc.at[1, G2:G2 + H2].set(wfc_f[:, 0])
    misc = misc.at[1, G2 + H2].set(bfc_f[0, 0])
    misc = misc.at[2:2 + H2, :G2].set(p["whh2"])
    misc = misc.at[8:8 + H1, :G2].set(wih2_f)

    return {
        "wih1": p["wih1"].astype(jnp.float32),   # hoisted projection stays f32
        "whh1": p["whh1"].astype(jnp.bfloat16),  # serial-path MXU operand
        "misc": misc,
    }


def init_params(key, D=54, H1=32, H2=2):
    ks = jax.random.split(key, 10)

    def u(k, shape, bound):
        return jax.random.uniform(k, shape, jnp.float32, -bound, bound)

    k1 = 1.0 / float(H1) ** 0.5
    k2 = 1.0 / float(H2) ** 0.5
    p = {}
    # PyTorch stores weight_ih_l0 as (4H, in); we keep the transposed (in, 4H)
    # layout so the kernel does row-major x @ W. Gate order is (i, f, g, o).
    p["wih1"] = u(ks[0], (D, 4 * H1), k1)
    p["whh1"] = u(ks[1], (H1, 4 * H1), k1)
    p["b1"] = u(ks[2], (1, 4 * H1), k1) + u(ks[3], (1, 4 * H1), k1)  # b_ih + b_hh
    p["wih2"] = u(ks[4], (H1, 4 * H2), k2)
    p["whh2"] = u(ks[5], (H2, 4 * H2), k2)
    p["b2"] = u(ks[6], (1, 4 * H2), k2) + u(ks[7], (1, 4 * H2), k2)
    p["wfc"] = u(ks[8], (H2, 1), k2)     # Linear(hidden_dim2, 1)
    p["bfc"] = u(ks[9], (1, 1), k2)

    # BatchNorm1d eval-mode defaults: gamma=1, beta=0, running_mean=0, running_var=1
    eps = 1e-5
    for name, H in (("bn1", H1), ("bn2", H2)):
        gamma = jnp.ones((H,), jnp.float32)
        beta = jnp.zeros((H,), jnp.float32)
        rmean = jnp.zeros((H,), jnp.float32)
        rvar = jnp.ones((H,), jnp.float32)
        scale = gamma / jnp.sqrt(rvar + eps)
        shift = beta - rmean * scale
        p[f"{name}_scale"] = scale.reshape(1, H)
        p[f"{name}_shift"] = shift.reshape(1, H)
    return p


def reference_forward(x, p):
    """Pure-JAX f32 reference (eval-mode semantics of the PyTorch module)."""
    def lstm(x_seq, wih, whh, b, H):
        B = x_seq.shape[0]

        def step(carry, x_t):
            h, c = carry
            g = x_t @ wih + h @ whh + b[0]
            i = jax.nn.sigmoid(g[:, :H])
            f = jax.nn.sigmoid(g[:, H:2 * H])
            gg = jnp.tanh(g[:, 2 * H:3 * H])
            o = jax.nn.sigmoid(g[:, 3 * H:])
            c = f * c + i * gg
            h = o * jnp.tanh(c)
            return (h, c), h

        h0 = jnp.zeros((B, H), jnp.float32)
        c0 = jnp.zeros((B, H), jnp.float32)
        _, hs = jax.lax.scan(step, (h0, c0), jnp.transpose(x_seq, (1, 0, 2)))
        return jnp.transpose(hs, (1, 0, 2))

    H1 = p["whh1"].shape[0]
    H2 = p["whh2"].shape[0]
    out = lstm(x, p["wih1"], p["whh1"], p["b1"], H1)
    out = jnp.maximum(out, 0.0) * p["bn1_scale"][0] + p["bn1_shift"][0]
    out = lstm(out, p["wih2"], p["whh2"], p["b2"], H2)
    out = out * p["bn2_scale"][0] + p["bn2_shift"][0]
    return out @ p["wfc"] + p["bfc"][0]


if __name__ == "__main__":
    B, T, D = 2, 8, 54      # batch, seq, input_dim (input_dim matches the module)
    H1, H2 = 32, 2

    key = jax.random.PRNGKey(0)
    kx, kp = jax.random.split(key)
    x = jax.random.normal(kx, (B, T, D), jnp.float32)
    params = init_params(kp, D=D, H1=H1, H2=H2)
    kernel_params = prepare_kernel_params(params)

    y = jax.block_until_ready(lstm1_forward(x, kernel_params, h2_dim=H2))
    assert y.shape == (B, T, 1), y.shape

    y_ref = jax.block_until_ready(reference_forward(x, params))
    # bf16 operands on the recurrent h1 @ W_hh1 MXU matmul introduce a small
    # (~1e-3 scale) deviation vs. the pure-f32 reference; all other math is f32.
    assert jnp.allclose(y, y_ref, rtol=5e-3, atol=5e-3), (
        float(jnp.max(jnp.abs(y - y_ref))))

    print("KERNEL_OK")
</pallas_src>

<mosaic_0001>
module attributes {stable_mosaic.version = 11 : i64} {
  func.func @lstm1_kernel(%arg0: memref<2x8x54xf32, #tpu.memory_space<vmem>>, %arg1: memref<54x128xf32, #tpu.memory_space<vmem>>, %arg2: memref<32x128xbf16, #tpu.memory_space<vmem>>, %arg3: memref<40x128xf32, #tpu.memory_space<vmem>>, %arg4: memref<2x8xf32, #tpu.memory_space<vmem>>) attributes {dimension_semantics = [], scalar_prefetch = 0 : i64, scratch_operands = 0 : i64, tpu.core_type = #tpu.core_type<tc>} {
    %c0 = arith.constant 0 : index
    %c0_0 = arith.constant 0 : index
    %0 = vector.load %arg2[%c0, %c0_0] : memref<32x128xbf16, #tpu.memory_space<vmem>>, vector<32x128xbf16>
    %c0_1 = arith.constant 0 : index
    %c0_2 = arith.constant 0 : index
    %1 = vector.load %arg3[%c0_1, %c0_2] : memref<40x128xf32, #tpu.memory_space<vmem>>, vector<40x128xf32>
    %2 = vector.extract_strided_slice %1 {offsets = [0, 0], sizes = [1, 128], strides = [1, 1]} : vector<40x128xf32> to vector<1x128xf32>
    %3 = vector.extract_strided_slice %1 {offsets = [1, 0], sizes = [1, 8], strides = [1, 1]} : vector<40x128xf32> to vector<1x8xf32>
    %4 = vector.extract_strided_slice %1 {offsets = [1, 8], sizes = [1, 2], strides = [1, 1]} : vector<40x128xf32> to vector<1x2xf32>
    %5 = vector.extract_strided_slice %1 {offsets = [1, 10], sizes = [1, 1], strides = [1, 1]} : vector<40x128xf32> to vector<1x1xf32>
    %6 = vector.extract_strided_slice %1 {offsets = [2, 0], sizes = [2, 8], strides = [1, 1]} : vector<40x128xf32> to vector<2x8xf32>
    %7 = vector.extract_strided_slice %1 {offsets = [8, 0], sizes = [32, 128], strides = [1, 1]} : vector<40x128xf32> to vector<32x128xf32>
    %c0_3 = arith.constant 0 : index
    %c0_4 = arith.constant 0 : index
    %c0_5 = arith.constant 0 : index
    %8 = vector.load %arg0[%c0_3, %c0_4, %c0_5] : memref<2x8x54xf32, #tpu.memory_space<vmem>>, vector<1x8x54xf32>
    %9 = vector.shape_cast %8 : vector<1x8x54xf32> to vector<8x54xf32>
    %c0_6 = arith.constant 0 : index
    %c0_7 = arith.constant 0 : index
    %10 = vector.load %arg1[%c0_6, %c0_7] : memref<54x128xf32, #tpu.memory_space<vmem>>, vector<54x128xf32>
    %cst = arith.constant dense<0.000000e+00> : vector<8x128xf32>
    %11 = tpu.matmul %9, %10, %cst {dimension_numbers = #tpu.dot_dimension_numbers<[1], [0], [0], [1], [0, 0, 1, 1], [], []>} : vector<8x54xf32>, vector<54x128xf32>, vector<8x128xf32> -> vector<8x128xf32>
    %12 = vector.broadcast %2 : vector<1x128xf32> to vector<8x128xf32>
    %13 = arith.addf %11, %12 : vector<8x128xf32>
    %c1 = arith.constant 1 : index
    %c0_8 = arith.constant 0 : index
    %c0_9 = arith.constant 0 : index
    %14 = vector.load %arg0[%c1, %c0_8, %c0_9] : memref<2x8x54xf32, #tpu.memory_space<vmem>>, vector<1x8x54xf32>
    %15 = vector.shape_cast %14 : vector<1x8x54xf32> to vector<8x54xf32>
    %c0_10 = arith.constant 0 : index
    %c0_11 = arith.constant 0 : index
    %16 = vector.load %arg1[%c0_10, %c0_11] : memref<54x128xf32, #tpu.memory_space<vmem>>, vector<54x128xf32>
    %cst_12 = arith.constant dense<0.000000e+00> : vector<8x128xf32>
    %17 = tpu.matmul %15, %16, %cst_12 {dimension_numbers = #tpu.dot_dimension_numbers<[1], [0], [0], [1], [0, 0, 1, 1], [], []>} : vector<8x54xf32>, vector<54x128xf32>, vector<8x128xf32> -> vector<8x128xf32>
    %18 = vector.broadcast %2 : vector<1x128xf32> to vector<8x128xf32>
    %19 = arith.addf %17, %18 : vector<8x128xf32>
    %20 = vector.extract_strided_slice %13 {offsets = [0, 0], sizes = [1, 128], strides = [1, 1]} : vector<8x128xf32> to vector<1x128xf32>
    %21 = vector.extract_strided_slice %19 {offsets = [0, 0], sizes = [1, 128], strides = [1, 1]} : vector<8x128xf32> to vector<1x128xf32>
    %22 = tpu.concatenate %20, %21 in 0 : vector<1x128xf32>, vector<1x128xf32> -> vector<2x128xf32>
    %23 = vector.extract_strided_slice %13 {offsets = [1, 0], sizes = [1, 128], strides = [1, 1]} : vector<8x128xf32> to vector<1x128xf32>
    %24 = vector.extract_strided_slice %19 {offsets = [1, 0], sizes = [1, 128], strides = [1, 1]} : vector<8x128xf32> to vector<1x128xf32>
    %25 = tpu.concatenate %23, %24 in 0 : vector<1x128xf32>, vector<1x128xf32> -> vector<2x128xf32>
    %26 = vector.extract_strided_slice %13 {offsets = [2, 0], sizes = [1, 128], strides = [1, 1]} : vector<8x128xf32> to vector<1x128xf32>
    %27 = vector.extract_strided_slice %19 {offsets = [2, 0], sizes = [1, 128], strides = [1, 1]} : vector<8x128xf32> to vector<1x128xf32>
    %28 = tpu.concatenate %26, %27 in 0 : vector<1x128xf32>, vector<1x128xf32> -> vector<2x128xf32>
    %29 = vector.extract_strided_slice %13 {offsets = [3, 0], sizes = [1, 128], strides = [1, 1]} : vector<8x128xf32> to vector<1x128xf32>
    %30 = vector.extract_strided_slice %19 {offsets = [3, 0], sizes = [1, 128], strides = [1, 1]} : vector<8x128xf32> to vector<1x128xf32>
    %31 = tpu.concatenate %29, %30 in 0 : vector<1x128xf32>, vector<1x128xf32> -> vector<2x128xf32>
    %32 = vector.extract_strided_slice %13 {offsets = [4, 0], sizes = [1, 128], strides = [1, 1]} : vector<8x128xf32> to vector<1x128xf32>
    %33 = vector.extract_strided_slice %19 {offsets = [4, 0], sizes = [1, 128], strides = [1, 1]} : vector<8x128xf32> to vector<1x128xf32>
    %34 = tpu.concatenate %32, %33 in 0 : vector<1x128xf32>, vector<1x128xf32> -> vector<2x128xf32>
    %35 = vector.extract_strided_slice %13 {offsets = [5, 0], sizes = [1, 128], strides = [1, 1]} : vector<8x128xf32> to vector<1x128xf32>
    %36 = vector.extract_strided_slice %19 {offsets = [5, 0], sizes = [1, 128], strides = [1, 1]} : vector<8x128xf32> to vector<1x128xf32>
    %37 = tpu.concatenate %35, %36 in 0 : vector<1x128xf32>, vector<1x128xf32> -> vector<2x128xf32>
    %38 = vector.extract_strided_slice %13 {offsets = [6, 0], sizes = [1, 128], strides = [1, 1]} : vector<8x128xf32> to vector<1x128xf32>
    %39 = vector.extract_strided_slice %19 {offsets = [6, 0], sizes = [1, 128], strides = [1, 1]} : vector<8x128xf32> to vector<1x128xf32>
    %40 = tpu.concatenate %38, %39 in 0 : vector<1x128xf32>, vector<1x128xf32> -> vector<2x128xf32>
    %41 = vector.extract_strided_slice %13 {offsets = [7, 0], sizes = [1, 128], strides = [1, 1]} : vector<8x128xf32> to vector<1x128xf32>
    %42 = vector.extract_strided_slice %19 {offsets = [7, 0], sizes = [1, 128], strides = [1, 1]} : vector<8x128xf32> to vector<1x128xf32>
    %43 = tpu.concatenate %41, %42 in 0 : vector<1x128xf32>, vector<1x128xf32> -> vector<2x128xf32>
    %cst_13 = arith.constant 0.000000e+00 : f32
    %44 = vector.broadcast %cst_13 : f32 to vector<2x32xf32>
    %cst_14 = arith.constant 0.000000e+00 : f32
    %45 = vector.broadcast %cst_14 : f32 to vector<2x32xf32>
    %46 = arith.truncf %44 : vector<2x32xf32> to vector<2x32xbf16>
    %cst_15 = arith.constant dense<0.000000e+00> : vector<2x128xf32>
    %47 = tpu.matmul %46, %0, %cst_15 {dimension_numbers = #tpu.dot_dimension_numbers<[1], [0], [0], [1], [0, 0, 1, 1], [], []>} : vector<2x32xbf16>, vector<32x128xbf16>, vector<2x128xf32> -> vector<2x128xf32>
    %48 = arith.addf %22, %47 : vector<2x128xf32>
    %49 = arith.negf %48 : vector<2x128xf32>
    %50 = math.exp %49 : vector<2x128xf32>
    %cst_16 = arith.constant 1.000000e+00 : f32
    %51 = vector.broadcast %cst_16 : f32 to vector<2x128xf32>
    %52 = arith.addf %51, %50 : vector<2x128xf32>
    %53 = arith.divf %51, %52 : vector<2x128xf32>
    %54 = math.tanh %48 : vector<2x128xf32>
    %55 = vector.extract_strided_slice %53 {offsets = [0, 0], sizes = [2, 32], strides = [1, 1]} : vector<2x128xf32> to vector<2x32xf32>
    %56 = vector.extract_strided_slice %53 {offsets = [0, 32], sizes = [2, 32], strides = [1, 1]} : vector<2x128xf32> to vector<2x32xf32>
    %57 = vector.extract_strided_slice %54 {offsets = [0, 64], sizes = [2, 32], strides = [1, 1]} : vector<2x128xf32> to vector<2x32xf32>
    %58 = vector.extract_strided_slice %53 {offsets = [0, 96], sizes = [2, 32], strides = [1, 1]} : vector<2x128xf32> to vector<2x32xf32>
    %59 = arith.mulf %56, %45 : vector<2x32xf32>
    %60 = arith.mulf %55, %57 : vector<2x32xf32>
    %61 = arith.addf %59, %60 : vector<2x32xf32>
    %62 = math.tanh %61 : vector<2x32xf32>
    %63 = arith.mulf %58, %62 : vector<2x32xf32>
    %cst_17 = arith.constant 0.000000e+00 : f32
    %64 = vector.broadcast %cst_17 : f32 to vector<2x32xf32>
    %65 = arith.maximumf %63, %64 : vector<2x32xf32>
    %66 = arith.truncf %63 : vector<2x32xf32> to vector<2x32xbf16>
    %cst_18 = arith.constant dense<0.000000e+00> : vector<2x128xf32>
    %67 = tpu.matmul %66, %0, %cst_18 {dimension_numbers = #tpu.dot_dimension_numbers<[1], [0], [0], [1], [0, 0, 1, 1], [], []>} : vector<2x32xbf16>, vector<32x128xbf16>, vector<2x128xf32> -> vector<2x128xf32>
    %68 = arith.addf %25, %67 : vector<2x128xf32>
    %69 = arith.negf %68 : vector<2x128xf32>
    %70 = math.exp %69 : vector<2x128xf32>
    %cst_19 = arith.constant 1.000000e+00 : f32
    %71 = vector.broadcast %cst_19 : f32 to vector<2x128xf32>
    %72 = arith.addf %71, %70 : vector<2x128xf32>
    %73 = arith.divf %71, %72 : vector<2x128xf32>
    %74 = math.tanh %68 : vector<2x128xf32>
    %75 = vector.extract_strided_slice %73 {offsets = [0, 0], sizes = [2, 32], strides = [1, 1]} : vector<2x128xf32> to vector<2x32xf32>
    %76 = vector.extract_strided_slice %73 {offsets = [0, 32], sizes = [2, 32], strides = [1, 1]} : vector<2x128xf32> to vector<2x32xf32>
    %77 = vector.extract_strided_slice %74 {offsets = [0, 64], sizes = [2, 32], strides = [1, 1]} : vector<2x128xf32> to vector<2x32xf32>
    %78 = vector.extract_strided_slice %73 {offsets = [0, 96], sizes = [2, 32], strides = [1, 1]} : vector<2x128xf32> to vector<2x32xf32>
    %79 = arith.mulf %76, %61 : vector<2x32xf32>
    %80 = arith.mulf %75, %77 : vector<2x32xf32>
    %81 = arith.addf %79, %80 : vector<2x32xf32>
    %82 = math.tanh %81 : vector<2x32xf32>
    %83 = arith.mulf %78, %82 : vector<2x32xf32>
    %cst_20 = arith.constant 0.000000e+00 : f32
    %84 = vector.broadcast %cst_20 : f32 to vector<2x32xf32>
    %85 = arith.maximumf %83, %84 : vector<2x32xf32>
    %86 = arith.truncf %83 : vector<2x32xf32> to vector<2x32xbf16>
    %cst_21 = arith.constant dense<0.000000e+00> : vector<2x128xf32>
    %87 = tpu.matmul %86, %0, %cst_21 {dimension_numbers = #tpu.dot_dimension_numbers<[1], [0], [0], [1], [0, 0, 1, 1], [], []>} : vector<2x32xbf16>, vector<32x128xbf16>, vector<2x128xf32> -> vector<2x128xf32>
    %88 = arith.addf %28, %87 : vector<2x128xf32>
    %89 = arith.negf %88 : vector<2x128xf32>
    %90 = math.exp %89 : vector<2x128xf32>
    %cst_22 = arith.constant 1.000000e+00 : f32
    %91 = vector.broadcast %cst_22 : f32 to vector<2x128xf32>
    %92 = arith.addf %91, %90 : vector<2x128xf32>
    %93 = arith.divf %91, %92 : vector<2x128xf32>
    %94 = math.tanh %88 : vector<2x128xf32>
    %95 = vector.extract_strided_slice %93 {offsets = [0, 0], sizes = [2, 32], strides = [1, 1]} : vector<2x128xf32> to vector<2x32xf32>
    %96 = vector.extract_strided_slice %93 {offsets = [0, 32], sizes = [2, 32], strides = [1, 1]} : vector<2x128xf32> to vector<2x32xf32>
    %97 = vector.extract_strided_slice %94 {offsets = [0, 64], sizes = [2, 32], strides = [1, 1]} : vector<2x128xf32> to vector<2x32xf32>
    %98 = vector.extract_strided_slice %93 {offsets = [0, 96], sizes = [2, 32], strides = [1, 1]} : vector<2x128xf32> to vector<2x32xf32>
    %99 = arith.mulf %96, %81 : vector<2x32xf32>
    %100 = arith.mulf %95, %97 : vector<2x32xf32>
    %101 = arith.addf %99, %100 : vector<2x32xf32>
    %102 = math.tanh %101 : vector<2x32xf32>
    %103 = arith.mulf %98, %102 : vector<2x32xf32>
    %cst_23 = arith.constant 0.000000e+00 : f32
    %104 = vector.broadcast %cst_23 : f32 to vector<2x32xf32>
    %105 = arith.maximumf %103, %104 : vector<2x32xf32>
    %106 = arith.truncf %103 : vector<2x32xf32> to vector<2x32xbf16>
    %cst_24 = arith.constant dense<0.000000e+00> : vector<2x128xf32>
    %107 = tpu.matmul %106, %0, %cst_24 {dimension_numbers = #tpu.dot_dimension_numbers<[1], [0], [0], [1], [0, 0, 1, 1], [], []>} : vector<2x32xbf16>, vector<32x128xbf16>, vector<2x128xf32> -> vector<2x128xf32>
    %108 = arith.addf %31, %107 : vector<2x128xf32>
    %109 = arith.negf %108 : vector<2x128xf32>
    %110 = math.exp %109 : vector<2x128xf32>
    %cst_25 = arith.constant 1.000000e+00 : f32
    %111 = vector.broadcast %cst_25 : f32 to vector<2x128xf32>
    %112 = arith.addf %111, %110 : vector<2x128xf32>
    %113 = arith.divf %111, %112 : vector<2x128xf32>
    %114 = math.tanh %108 : vector<2x128xf32>
    %115 = vector.extract_strided_slice %113 {offsets = [0, 0], sizes = [2, 32], strides = [1, 1]} : vector<2x128xf32> to vector<2x32xf32>
    %116 = vector.extract_strided_slice %113 {offsets = [0, 32], sizes = [2, 32], strides = [1, 1]} : vector<2x128xf32> to vector<2x32xf32>
    %117 = vector.extract_strided_slice %114 {offsets = [0, 64], sizes = [2, 32], strides = [1, 1]} : vector<2x128xf32> to vector<2x32xf32>
    %118 = vector.extract_strided_slice %113 {offsets = [0, 96], sizes = [2, 32], strides = [1, 1]} : vector<2x128xf32> to vector<2x32xf32>
    %119 = arith.mulf %116, %101 : vector<2x32xf32>
    %120 = arith.mulf %115, %117 : vector<2x32xf32>
    %121 = arith.addf %119, %120 : vector<2x32xf32>
    %122 = math.tanh %121 : vector<2x32xf32>
    %123 = arith.mulf %118, %122 : vector<2x32xf32>
    %cst_26 = arith.constant 0.000000e+00 : f32
    %124 = vector.broadcast %cst_26 : f32 to vector<2x32xf32>
    %125 = arith.maximumf %123, %124 : vector<2x32xf32>
    %126 = arith.truncf %123 : vector<2x32xf32> to vector<2x32xbf16>
    %cst_27 = arith.constant dense<0.000000e+00> : vector<2x128xf32>
    %127 = tpu.matmul %126, %0, %cst_27 {dimension_numbers = #tpu.dot_dimension_numbers<[1], [0], [0], [1], [0, 0, 1, 1], [], []>} : vector<2x32xbf16>, vector<32x128xbf16>, vector<2x128xf32> -> vector<2x128xf32>
    %128 = arith.addf %34, %127 : vector<2x128xf32>
    %129 = arith.negf %128 : vector<2x128xf32>
    %130 = math.exp %129 : vector<2x128xf32>
    %cst_28 = arith.constant 1.000000e+00 : f32
    %131 = vector.broadcast %cst_28 : f32 to vector<2x128xf32>
    %132 = arith.addf %131, %130 : vector<2x128xf32>
    %133 = arith.divf %131, %132 : vector<2x128xf32>
    %134 = math.tanh %128 : vector<2x128xf32>
    %135 = vector.extract_strided_slice %133 {offsets = [0, 0], sizes = [2, 32], strides = [1, 1]} : vector<2x128xf32> to vector<2x32xf32>
    %136 = vector.extract_strided_slice %133 {offsets = [0, 32], sizes = [2, 32], strides = [1, 1]} : vector<2x128xf32> to vector<2x32xf32>
    %137 = vector.extract_strided_slice %134 {offsets = [0, 64], sizes = [2, 32], strides = [1, 1]} : vector<2x128xf32> to vector<2x32xf32>
    %138 = vector.extract_strided_slice %133 {offsets = [0, 96], sizes = [2, 32], strides = [1, 1]} : vector<2x128xf32> to vector<2x32xf32>
    %139 = arith.mulf %136, %121 : vector<2x32xf32>
    %140 = arith.mulf %135, %137 : vector<2x32xf32>
    %141 = arith.addf %139, %140 : vector<2x32xf32>
    %142 = math.tanh %141 : vector<2x32xf32>
    %143 = arith.mulf %138, %142 : vector<2x32xf32>
    %cst_29 = arith.constant 0.000000e+00 : f32
    %144 = vector.broadcast %cst_29 : f32 to vector<2x32xf32>
    %145 = arith.maximumf %143, %144 : vector<2x32xf32>
    %146 = arith.truncf %143 : vector<2x32xf32> to vector<2x32xbf16>
    %cst_30 = arith.constant dense<0.000000e+00> : vector<2x128xf32>
    %147 = tpu.matmul %146, %0, %cst_30 {dimension_numbers = #tpu.dot_dimension_numbers<[1], [0], [0], [1], [0, 0, 1, 1], [], []>} : vector<2x32xbf16>, vector<32x128xbf16>, vector<2x128xf32> -> vector<2x128xf32>
    %148 = arith.addf %37, %147 : vector<2x128xf32>
    %149 = arith.negf %148 : vector<2x128xf32>
    %150 = math.exp %149 : vector<2x128xf32>
    %cst_31 = arith.constant 1.000000e+00 : f32
    %151 = vector.broadcast %cst_31 : f32 to vector<2x128xf32>
    %152 = arith.addf %151, %150 : vector<2x128xf32>
    %153 = arith.divf %151, %152 : vector<2x128xf32>
    %154 = math.tanh %148 : vector<2x128xf32>
    %155 = vector.extract_strided_slice %153 {offsets = [0, 0], sizes = [2, 32], strides = [1, 1]} : vector<2x128xf32> to vector<2x32xf32>
    %156 = vector.extract_strided_slice %153 {offsets = [0, 32], sizes = [2, 32], strides = [1, 1]} : vector<2x128xf32> to vector<2x32xf32>
    %157 = vector.extract_strided_slice %154 {offsets = [0, 64], sizes = [2, 32], strides = [1, 1]} : vector<2x128xf32> to vector<2x32xf32>
    %158 = vector.extract_strided_slice %153 {offsets = [0, 96], sizes = [2, 32], strides = [1, 1]} : vector<2x128xf32> to vector<2x32xf32>
    %159 = arith.mulf %156, %141 : vector<2x32xf32>
    %160 = arith.mulf %155, %157 : vector<2x32xf32>
    %161 = arith.addf %159, %160 : vector<2x32xf32>
    %162 = math.tanh %161 : vector<2x32xf32>
    %163 = arith.mulf %158, %162 : vector<2x32xf32>
    %cst_32 = arith.constant 0.000000e+00 : f32
    %164 = vector.broadcast %cst_32 : f32 to vector<2x32xf32>
    %165 = arith.maximumf %163, %164 : vector<2x32xf32>
    %166 = arith.truncf %163 : vector<2x32xf32> to vector<2x32xbf16>
    %cst_33 = arith.constant dense<0.000000e+00> : vector<2x128xf32>
    %167 = tpu.matmul %166, %0, %cst_33 {dimension_numbers = #tpu.dot_dimension_numbers<[1], [0], [0], [1], [0, 0, 1, 1], [], []>} : vector<2x32xbf16>, vector<32x128xbf16>, vector<2x128xf32> -> vector<2x128xf32>
    %168 = arith.addf %40, %167 : vector<2x128xf32>
    %169 = arith.negf %168 : vector<2x128xf32>
    %170 = math.exp %169 : vector<2x128xf32>
    %cst_34 = arith.constant 1.000000e+00 : f32
    %171 = vector.broadcast %cst_34 : f32 to vector<2x128xf32>
    %172 = arith.addf %171, %170 : vector<2x128xf32>
    %173 = arith.divf %171, %172 : vector<2x128xf32>
    %174 = math.tanh %168 : vector<2x128xf32>
    %175 = vector.extract_strided_slice %173 {offsets = [0, 0], sizes = [2, 32], strides = [1, 1]} : vector<2x128xf32> to vector<2x32xf32>
    %176 = vector.extract_strided_slice %173 {offsets = [0, 32], sizes = [2, 32], strides = [1, 1]} : vector<2x128xf32> to vector<2x32xf32>
    %177 = vector.extract_strided_slice %174 {offsets = [0, 64], sizes = [2, 32], strides = [1, 1]} : vector<2x128xf32> to vector<2x32xf32>
    %178 = vector.extract_strided_slice %173 {offsets = [0, 96], sizes = [2, 32], strides = [1, 1]} : vector<2x128xf32> to vector<2x32xf32>
    %179 = arith.mulf %176, %161 : vector<2x32xf32>
    %180 = arith.mulf %175, %177 : vector<2x32xf32>
    %181 = arith.addf %179, %180 : vector<2x32xf32>
    %182 = math.tanh %181 : vector<2x32xf32>
    %183 = arith.mulf %178, %182 : vector<2x32xf32>
    %cst_35 = arith.constant 0.000000e+00 : f32
    %184 = vector.broadcast %cst_35 : f32 to vector<2x32xf32>
    %185 = arith.maximumf %183, %184 : vector<2x32xf32>
    %186 = arith.truncf %183 : vector<2x32xf32> to vector<2x32xbf16>
    %cst_36 = arith.constant dense<0.000000e+00> : vector<2x128xf32>
    %187 = tpu.matmul %186, %0, %cst_36 {dimension_numbers = #tpu.dot_dimension_numbers<[1], [0], [0], [1], [0, 0, 1, 1], [], []>} : vector<2x32xbf16>, vector<32x128xbf16>, vector<2x128xf32> -> vector<2x128xf32>
    %188 = arith.addf %43, %187 : vector<2x128xf32>
    %189 = arith.negf %188 : vector<2x128xf32>
    %190 = math.exp %189 : vector<2x128xf32>
    %cst_37 = arith.constant 1.000000e+00 : f32
    %191 = vector.broadcast %cst_37 : f32 to vector<2x128xf32>
    %192 = arith.addf %191, %190 : vector<2x128xf32>
    %193 = arith.divf %191, %192 : vector<2x128xf32>
    %194 = math.tanh %188 : vector<2x128xf32>
    %195 = vector.extract_strided_slice %193 {offsets = [0, 0], sizes = [2, 32], strides = [1, 1]} : vector<2x128xf32> to vector<2x32xf32>
    %196 = vector.extract_strided_slice %193 {offsets = [0, 32], sizes = [2, 32], strides = [1, 1]} : vector<2x128xf32> to vector<2x32xf32>
    %197 = vector.extract_strided_slice %194 {offsets = [0, 64], sizes = [2, 32], strides = [1, 1]} : vector<2x128xf32> to vector<2x32xf32>
    %198 = vector.extract_strided_slice %193 {offsets = [0, 96], sizes = [2, 32], strides = [1, 1]} : vector<2x128xf32> to vector<2x32xf32>
    %199 = arith.mulf %196, %181 : vector<2x32xf32>
    %200 = arith.mulf %195, %197 : vector<2x32xf32>
    %201 = arith.addf %199, %200 : vector<2x32xf32>
    %202 = math.tanh %201 : vector<2x32xf32>
    %203 = arith.mulf %198, %202 : vector<2x32xf32>
    %cst_38 = arith.constant 0.000000e+00 : f32
    %204 = vector.broadcast %cst_38 : f32 to vector<2x32xf32>
    %205 = arith.maximumf %203, %204 : vector<2x32xf32>
    %206 = tpu.concatenate %65, %85, %105, %125, %145, %165, %185, %205 in 0 : vector<2x32xf32>, vector<2x32xf32>, vector<2x32xf32>, vector<2x32xf32>, vector<2x32xf32>, vector<2x32xf32>, vector<2x32xf32>, vector<2x32xf32> -> vector<16x32xf32>
    %cst_39 = arith.constant dense<0.000000e+00> : vector<16x128xf32>
    %207 = tpu.matmul %206, %7, %cst_39 {dimension_numbers = #tpu.dot_dimension_numbers<[1], [0], [0], [1], [0, 0, 1, 1], [], []>} : vector<16x32xf32>, vector<32x128xf32>, vector<16x128xf32> -> vector<16x128xf32>
    %208 = vector.extract_strided_slice %207 {offsets = [0, 0], sizes = [16, 8], strides = [1, 1]} : vector<16x128xf32> to vector<16x8xf32>
    %209 = vector.broadcast %3 : vector<1x8xf32> to vector<16x8xf32>
    %210 = arith.addf %208, %209 : vector<16x8xf32>
    %cst_40 = arith.constant 0.000000e+00 : f32
    %211 = vector.broadcast %cst_40 : f32 to vector<2x2xf32>
    %cst_41 = arith.constant 0.000000e+00 : f32
    %212 = vector.broadcast %cst_41 : f32 to vector<2x2xf32>
    %213 = vector.extract_strided_slice %210 {offsets = [0, 0], sizes = [2, 8], strides = [1, 1]} : vector<16x8xf32> to vector<2x8xf32>
    %214 = vector.extract_strided_slice %211 {offsets = [0, 0], sizes = [2, 1], strides = [1, 1]} : vector<2x2xf32> to vector<2x1xf32>
    %215 = vector.extract_strided_slice %6 {offsets = [0, 0], sizes = [1, 8], strides = [1, 1]} : vector<2x8xf32> to vector<1x8xf32>
    %216 = vector.broadcast %214 : vector<2x1xf32> to vector<2x8xf32>
    %217 = vector.broadcast %215 : vector<1x8xf32> to vector<2x8xf32>
    %218 = arith.mulf %216, %217 : vector<2x8xf32>
    %219 = arith.addf %213, %218 : vector<2x8xf32>
    %220 = vector.extract_strided_slice %211 {offsets = [0, 1], sizes = [2, 1], strides = [1, 1]} : vector<2x2xf32> to vector<2x1xf32>
    %221 = vector.extract_strided_slice %6 {offsets = [1, 0], sizes = [1, 8], strides = [1, 1]} : vector<2x8xf32> to vector<1x8xf32>
    %222 = vector.broadcast %220 : vector<2x1xf32> to vector<2x8xf32>
    %223 = vector.broadcast %221 : vector<1x8xf32> to vector<2x8xf32>
    %224 = arith.mulf %222, %223 : vector<2x8xf32>
    %225 = arith.addf %219, %224 : vector<2x8xf32>
    %226 = arith.negf %225 : vector<2x8xf32>
    %227 = math.exp %226 : vector<2x8xf32>
    %cst_42 = arith.constant 1.000000e+00 : f32
    %228 = vector.broadcast %cst_42 : f32 to vector<2x8xf32>
    %229 = arith.addf %228, %227 : vector<2x8xf32>
    %230 = arith.divf %228, %229 : vector<2x8xf32>
    %231 = math.tanh %225 : vector<2x8xf32>
    %232 = vector.extract_strided_slice %230 {offsets = [0, 0], sizes = [2, 2], strides = [1, 1]} : vector<2x8xf32> to vector<2x2xf32>
    %233 = vector.extract_strided_slice %230 {offsets = [0, 2], sizes = [2, 2], strides = [1, 1]} : vector<2x8xf32> to vector<2x2xf32>
    %234 = vector.extract_strided_slice %231 {offsets = [0, 4], sizes = [2, 2], strides = [1, 1]} : vector<2x8xf32> to vector<2x2xf32>
    %235 = vector.extract_strided_slice %230 {offsets = [0, 6], sizes = [2, 2], strides = [1, 1]} : vector<2x8xf32> to vector<2x2xf32>
    %236 = arith.mulf %233, %212 : vector<2x2xf32>
    %237 = arith.mulf %232, %234 : vector<2x2xf32>
    %238 = arith.addf %236, %237 : vector<2x2xf32>
    %239 = math.tanh %238 : vector<2x2xf32>
    %240 = arith.mulf %235, %239 : vector<2x2xf32>
    %241 = vector.extract_strided_slice %240 {offsets = [0, 0], sizes = [2, 1], strides = [1, 1]} : vector<2x2xf32> to vector<2x1xf32>
    %242 = vector.extract_strided_slice %4 {offsets = [0, 0], sizes = [1, 1], strides = [1, 1]} : vector<1x2xf32> to vector<1x1xf32>
    %243 = vector.broadcast %242 : vector<1x1xf32> to vector<2x1xf32>
    %244 = arith.mulf %241, %243 : vector<2x1xf32>
    %245 = vector.broadcast %5 : vector<1x1xf32> to vector<2x1xf32>
    %246 = arith.addf %245, %244 : vector<2x1xf32>
    %247 = vector.extract_strided_slice %240 {offsets = [0, 1], sizes = [2, 1], strides = [1, 1]} : vector<2x2xf32> to vector<2x1xf32>
    %248 = vector.extract_strided_slice %4 {offsets = [0, 1], sizes = [1, 1], strides = [1, 1]} : vector<1x2xf32> to vector<1x1xf32>
    %249 = vector.broadcast %248 : vector<1x1xf32> to vector<2x1xf32>
    %250 = arith.mulf %247, %249 : vector<2x1xf32>
    %251 = arith.addf %246, %250 : vector<2x1xf32>
    %252 = vector.extract_strided_slice %210 {offsets = [2, 0], sizes = [2, 8], strides = [1, 1]} : vector<16x8xf32> to vector<2x8xf32>
    %253 = vector.extract_strided_slice %240 {offsets = [0, 0], sizes = [2, 1], strides = [1, 1]} : vector<2x2xf32> to vector<2x1xf32>
    %254 = vector.extract_strided_slice %6 {offsets = [0, 0], sizes = [1, 8], strides = [1, 1]} : vector<2x8xf32> to vector<1x8xf32>
    %255 = vector.broadcast %253 : vector<2x1xf32> to vector<2x8xf32>
    %256 = vector.broadcast %254 : vector<1x8xf32> to vector<2x8xf32>
    %257 = arith.mulf %255, %256 : vector<2x8xf32>
    %258 = arith.addf %252, %257 : vector<2x8xf32>
    %259 = vector.extract_strided_slice %240 {offsets = [0, 1], sizes = [2, 1], strides = [1, 1]} : vector<2x2xf32> to vector<2x1xf32>
    %260 = vector.extract_strided_slice %6 {offsets = [1, 0], sizes = [1, 8], strides = [1, 1]} : vector<2x8xf32> to vector<1x8xf32>
    %261 = vector.broadcast %259 : vector<2x1xf32> to vector<2x8xf32>
    %262 = vector.broadcast %260 : vector<1x8xf32> to vector<2x8xf32>
    %263 = arith.mulf %261, %262 : vector<2x8xf32>
    %264 = arith.addf %258, %263 : vector<2x8xf32>
    %265 = arith.negf %264 : vector<2x8xf32>
    %266 = math.exp %265 : vector<2x8xf32>
    %cst_43 = arith.constant 1.000000e+00 : f32
    %267 = vector.broadcast %cst_43 : f32 to vector<2x8xf32>
    %268 = arith.addf %267, %266 : vector<2x8xf32>
    %269 = arith.divf %267, %268 : vector<2x8xf32>
    %270 = math.tanh %264 : vector<2x8xf32>
    %271 = vector.extract_strided_slice %269 {offsets = [0, 0], sizes = [2, 2], strides = [1, 1]} : vector<2x8xf32> to vector<2x2xf32>
    %272 = vector.extract_strided_slice %269 {offsets = [0, 2], sizes = [2, 2], strides = [1, 1]} : vector<2x8xf32> to vector<2x2xf32>
    %273 = vector.extract_strided_slice %270 {offsets = [0, 4], sizes = [2, 2], strides = [1, 1]} : vector<2x8xf32> to vector<2x2xf32>
    %274 = vector.extract_strided_slice %269 {offsets = [0, 6], sizes = [2, 2], strides = [1, 1]} : vector<2x8xf32> to vector<2x2xf32>
    %275 = arith.mulf %272, %238 : vector<2x2xf32>
    %276 = arith.mulf %271, %273 : vector<2x2xf32>
    %277 = arith.addf %275, %276 : vector<2x2xf32>
    %278 = math.tanh %277 : vector<2x2xf32>
    %279 = arith.mulf %274, %278 : vector<2x2xf32>
    %280 = vector.extract_strided_slice %279 {offsets = [0, 0], sizes = [2, 1], strides = [1, 1]} : vector<2x2xf32> to vector<2x1xf32>
    %281 = vector.extract_strided_slice %4 {offsets = [0, 0], sizes = [1, 1], strides = [1, 1]} : vector<1x2xf32> to vector<1x1xf32>
    %282 = vector.broadcast %281 : vector<1x1xf32> to vector<2x1xf32>
    %283 = arith.mulf %280, %282 : vector<2x1xf32>
    %284 = vector.broadcast %5 : vector<1x1xf32> to vector<2x1xf32>
    %285 = arith.addf %284, %283 : vector<2x1xf32>
    %286 = vector.extract_strided_slice %279 {offsets = [0, 1], sizes = [2, 1], strides = [1, 1]} : vector<2x2xf32> to vector<2x1xf32>
    %287 = vector.extract_strided_slice %4 {offsets = [0, 1], sizes = [1, 1], strides = [1, 1]} : vector<1x2xf32> to vector<1x1xf32>
    %288 = vector.broadcast %287 : vector<1x1xf32> to vector<2x1xf32>
    %289 = arith.mulf %286, %288 : vector<2x1xf32>
    %290 = arith.addf %285, %289 : vector<2x1xf32>
    %291 = vector.extract_strided_slice %210 {offsets = [4, 0], sizes = [2, 8], strides = [1, 1]} : vector<16x8xf32> to vector<2x8xf32>
    %292 = vector.extract_strided_slice %279 {offsets = [0, 0], sizes = [2, 1], strides = [1, 1]} : vector<2x2xf32> to vector<2x1xf32>
    %293 = vector.extract_strided_slice %6 {offsets = [0, 0], sizes = [1, 8], strides = [1, 1]} : vector<2x8xf32> to vector<1x8xf32>
    %294 = vector.broadcast %292 : vector<2x1xf32> to vector<2x8xf32>
    %295 = vector.broadcast %293 : vector<1x8xf32> to vector<2x8xf32>
    %296 = arith.mulf %294, %295 : vector<2x8xf32>
    %297 = arith.addf %291, %296 : vector<2x8xf32>
    %298 = vector.extract_strided_slice %279 {offsets = [0, 1], sizes = [2, 1], strides = [1, 1]} : vector<2x2xf32> to vector<2x1xf32>
    %299 = vector.extract_strided_slice %6 {offsets = [1, 0], sizes = [1, 8], strides = [1, 1]} : vector<2x8xf32> to vector<1x8xf32>
    %300 = vector.broadcast %298 : vector<2x1xf32> to vector<2x8xf32>
    %301 = vector.broadcast %299 : vector<1x8xf32> to vector<2x8xf32>
    %302 = arith.mulf %300, %301 : vector<2x8xf32>
    %303 = arith.addf %297, %302 : vector<2x8xf32>
    %304 = arith.negf %303 : vector<2x8xf32>
    %305 = math.exp %304 : vector<2x8xf32>
    %cst_44 = arith.constant 1.000000e+00 : f32
    %306 = vector.broadcast %cst_44 : f32 to vector<2x8xf32>
    %307 = arith.addf %306, %305 : vector<2x8xf32>
    %308 = arith.divf %306, %307 : vector<2x8xf32>
    %309 = math.tanh %303 : vector<2x8xf32>
    %310 = vector.extract_strided_slice %308 {offsets = [0, 0], sizes = [2, 2], strides = [1, 1]} : vector<2x8xf32> to vector<2x2xf32>
    %311 = vector.extract_strided_slice %308 {offsets = [0, 2], sizes = [2, 2], strides = [1, 1]} : vector<2x8xf32> to vector<2x2xf32>
    %312 = vector.extract_strided_slice %309 {offsets = [0, 4], sizes = [2, 2], strides = [1, 1]} : vector<2x8xf32> to vector<2x2xf32>
    %313 = vector.extract_strided_slice %308 {offsets = [0, 6], sizes = [2, 2], strides = [1, 1]} : vector<2x8xf32> to vector<2x2xf32>
    %314 = arith.mulf %311, %277 : vector<2x2xf32>
    %315 = arith.mulf %310, %312 : vector<2x2xf32>
    %316 = arith.addf %314, %315 : vector<2x2xf32>
    %317 = math.tanh %316 : vector<2x2xf32>
    %318 = arith.mulf %313, %317 : vector<2x2xf32>
    %319 = vector.extract_strided_slice %318 {offsets = [0, 0], sizes = [2, 1], strides = [1, 1]} : vector<2x2xf32> to vector<2x1xf32>
    %320 = vector.extract_strided_slice %4 {offsets = [0, 0], sizes = [1, 1], strides = [1, 1]} : vector<1x2xf32> to vector<1x1xf32>
    %321 = vector.broadcast %320 : vector<1x1xf32> to vector<2x1xf32>
    %322 = arith.mulf %319, %321 : vector<2x1xf32>
    %323 = vector.broadcast %5 : vector<1x1xf32> to vector<2x1xf32>
    %324 = arith.addf %323, %322 : vector<2x1xf32>
    %325 = vector.extract_strided_slice %318 {offsets = [0, 1], sizes = [2, 1], strides = [1, 1]} : vector<2x2xf32> to vector<2x1xf32>
    %326 = vector.extract_strided_slice %4 {offsets = [0, 1], sizes = [1, 1], strides = [1, 1]} : vector<1x2xf32> to vector<1x1xf32>
    %327 = vector.broadcast %326 : vector<1x1xf32> to vector<2x1xf32>
    %328 = arith.mulf %325, %327 : vector<2x1xf32>
    %329 = arith.addf %324, %328 : vector<2x1xf32>
    %330 = vector.extract_strided_slice %210 {offsets = [6, 0], sizes = [2, 8], strides = [1, 1]} : vector<16x8xf32> to vector<2x8xf32>
    %331 = vector.extract_strided_slice %318 {offsets = [0, 0], sizes = [2, 1], strides = [1, 1]} : vector<2x2xf32> to vector<2x1xf32>
    %332 = vector.extract_strided_slice %6 {offsets = [0, 0], sizes = [1, 8], strides = [1, 1]} : vector<2x8xf32> to vector<1x8xf32>
    %333 = vector.broadcast %331 : vector<2x1xf32> to vector<2x8xf32>
    %334 = vector.broadcast %332 : vector<1x8xf32> to vector<2x8xf32>
    %335 = arith.mulf %333, %334 : vector<2x8xf32>
    %336 = arith.addf %330, %335 : vector<2x8xf32>
    %337 = vector.extract_strided_slice %318 {offsets = [0, 1], sizes = [2, 1], strides = [1, 1]} : vector<2x2xf32> to vector<2x1xf32>
    %338 = vector.extract_strided_slice %6 {offsets = [1, 0], sizes = [1, 8], strides = [1, 1]} : vector<2x8xf32> to vector<1x8xf32>
    %339 = vector.broadcast %337 : vector<2x1xf32> to vector<2x8xf32>
    %340 = vector.broadcast %338 : vector<1x8xf32> to vector<2x8xf32>
    %341 = arith.mulf %339, %340 : vector<2x8xf32>
    %342 = arith.addf %336, %341 : vector<2x8xf32>
    %343 = arith.negf %342 : vector<2x8xf32>
    %344 = math.exp %343 : vector<2x8xf32>
    %cst_45 = arith.constant 1.000000e+00 : f32
    %345 = vector.broadcast %cst_45 : f32 to vector<2x8xf32>
    %346 = arith.addf %345, %344 : vector<2x8xf32>
    %347 = arith.divf %345, %346 : vector<2x8xf32>
    %348 = math.tanh %342 : vector<2x8xf32>
    %349 = vector.extract_strided_slice %347 {offsets = [0, 0], sizes = [2, 2], strides = [1, 1]} : vector<2x8xf32> to vector<2x2xf32>
    %350 = vector.extract_strided_slice %347 {offsets = [0, 2], sizes = [2, 2], strides = [1, 1]} : vector<2x8xf32> to vector<2x2xf32>
    %351 = vector.extract_strided_slice %348 {offsets = [0, 4], sizes = [2, 2], strides = [1, 1]} : vector<2x8xf32> to vector<2x2xf32>
    %352 = vector.extract_strided_slice %347 {offsets = [0, 6], sizes = [2, 2], strides = [1, 1]} : vector<2x8xf32> to vector<2x2xf32>
    %353 = arith.mulf %350, %316 : vector<2x2xf32>
    %354 = arith.mulf %349, %351 : vector<2x2xf32>
    %355 = arith.addf %353, %354 : vector<2x2xf32>
    %356 = math.tanh %355 : vector<2x2xf32>
    %357 = arith.mulf %352, %356 : vector<2x2xf32>
    %358 = vector.extract_strided_slice %357 {offsets = [0, 0], sizes = [2, 1], strides = [1, 1]} : vector<2x2xf32> to vector<2x1xf32>
    %359 = vector.extract_strided_slice %4 {offsets = [0, 0], sizes = [1, 1], strides = [1, 1]} : vector<1x2xf32> to vector<1x1xf32>
    %360 = vector.broadcast %359 : vector<1x1xf32> to vector<2x1xf32>
    %361 = arith.mulf %358, %360 : vector<2x1xf32>
    %362 = vector.broadcast %5 : vector<1x1xf32> to vector<2x1xf32>
    %363 = arith.addf %362, %361 : vector<2x1xf32>
    %364 = vector.extract_strided_slice %357 {offsets = [0, 1], sizes = [2, 1], strides = [1, 1]} : vector<2x2xf32> to vector<2x1xf32>
    %365 = vector.extract_strided_slice %4 {offsets = [0, 1], sizes = [1, 1], strides = [1, 1]} : vector<1x2xf32> to vector<1x1xf32>
    %366 = vector.broadcast %365 : vector<1x1xf32> to vector<2x1xf32>
    %367 = arith.mulf %364, %366 : vector<2x1xf32>
    %368 = arith.addf %363, %367 : vector<2x1xf32>
    %369 = vector.extract_strided_slice %210 {offsets = [8, 0], sizes = [2, 8], strides = [1, 1]} : vector<16x8xf32> to vector<2x8xf32>
    %370 = vector.extract_strided_slice %357 {offsets = [0, 0], sizes = [2, 1], strides = [1, 1]} : vector<2x2xf32> to vector<2x1xf32>
    %371 = vector.extract_strided_slice %6 {offsets = [0, 0], sizes = [1, 8], strides = [1, 1]} : vector<2x8xf32> to vector<1x8xf32>
    %372 = vector.broadcast %370 : vector<2x1xf32> to vector<2x8xf32>
    %373 = vector.broadcast %371 : vector<1x8xf32> to vector<2x8xf32>
    %374 = arith.mulf %372, %373 : vector<2x8xf32>
    %375 = arith.addf %369, %374 : vector<2x8xf32>
    %376 = vector.extract_strided_slice %357 {offsets = [0, 1], sizes = [2, 1], strides = [1, 1]} : vector<2x2xf32> to vector<2x1xf32>
    %377 = vector.extract_strided_slice %6 {offsets = [1, 0], sizes = [1, 8], strides = [1, 1]} : vector<2x8xf32> to vector<1x8xf32>
    %378 = vector.broadcast %376 : vector<2x1xf32> to vector<2x8xf32>
    %379 = vector.broadcast %377 : vector<1x8xf32> to vector<2x8xf32>
    %380 = arith.mulf %378, %379 : vector<2x8xf32>
    %381 = arith.addf %375, %380 : vector<2x8xf32>
    %382 = arith.negf %381 : vector<2x8xf32>
    %383 = math.exp %382 : vector<2x8xf32>
    %cst_46 = arith.constant 1.000000e+00 : f32
    %384 = vector.broadcast %cst_46 : f32 to vector<2x8xf32>
    %385 = arith.addf %384, %383 : vector<2x8xf32>
    %386 = arith.divf %384, %385 : vector<2x8xf32>
    %387 = math.tanh %381 : vector<2x8xf32>
    %388 = vector.extract_strided_slice %386 {offsets = [0, 0], sizes = [2, 2], strides = [1, 1]} : vector<2x8xf32> to vector<2x2xf32>
    %389 = vector.extract_strided_slice %386 {offsets = [0, 2], sizes = [2, 2], strides = [1, 1]} : vector<2x8xf32> to vector<2x2xf32>
    %390 = vector.extract_strided_slice %387 {offsets = [0, 4], sizes = [2, 2], strides = [1, 1]} : vector<2x8xf32> to vector<2x2xf32>
    %391 = vector.extract_strided_slice %386 {offsets = [0, 6], sizes = [2, 2], strides = [1, 1]} : vector<2x8xf32> to vector<2x2xf32>
    %392 = arith.mulf %389, %355 : vector<2x2xf32>
    %393 = arith.mulf %388, %390 : vector<2x2xf32>
    %394 = arith.addf %392, %393 : vector<2x2xf32>
    %395 = math.tanh %394 : vector<2x2xf32>
    %396 = arith.mulf %391, %395 : vector<2x2xf32>
    %397 = vector.extract_strided_slice %396 {offsets = [0, 0], sizes = [2, 1], strides = [1, 1]} : vector<2x2xf32> to vector<2x1xf32>
    %398 = vector.extract_strided_slice %4 {offsets = [0, 0], sizes = [1, 1], strides = [1, 1]} : vector<1x2xf32> to vector<1x1xf32>
    %399 = vector.broadcast %398 : vector<1x1xf32> to vector<2x1xf32>
    %400 = arith.mulf %397, %399 : vector<2x1xf32>
    %401 = vector.broadcast %5 : vector<1x1xf32> to vector<2x1xf32>
    %402 = arith.addf %401, %400 : vector<2x1xf32>
    %403 = vector.extract_strided_slice %396 {offsets = [0, 1], sizes = [2, 1], strides = [1, 1]} : vector<2x2xf32> to vector<2x1xf32>
    %404 = vector.extract_strided_slice %4 {offsets = [0, 1], sizes = [1, 1], strides = [1, 1]} : vector<1x2xf32> to vector<1x1xf32>
    %405 = vector.broadcast %404 : vector<1x1xf32> to vector<2x1xf32>
    %406 = arith.mulf %403, %405 : vector<2x1xf32>
    %407 = arith.addf %402, %406 : vector<2x1xf32>
    %408 = vector.extract_strided_slice %210 {offsets = [10, 0], sizes = [2, 8], strides = [1, 1]} : vector<16x8xf32> to vector<2x8xf32>
    %409 = vector.extract_strided_slice %396 {offsets = [0, 0], sizes = [2, 1], strides = [1, 1]} : vector<2x2xf32> to vector<2x1xf32>
    %410 = vector.extract_strided_slice %6 {offsets = [0, 0], sizes = [1, 8], strides = [1, 1]} : vector<2x8xf32> to vector<1x8xf32>
    %411 = vector.broadcast %409 : vector<2x1xf32> to vector<2x8xf32>
    %412 = vector.broadcast %410 : vector<1x8xf32> to vector<2x8xf32>
    %413 = arith.mulf %411, %412 : vector<2x8xf32>
    %414 = arith.addf %408, %413 : vector<2x8xf32>
    %415 = vector.extract_strided_slice %396 {offsets = [0, 1], sizes = [2, 1], strides = [1, 1]} : vector<2x2xf32> to vector<2x1xf32>
    %416 = vector.extract_strided_slice %6 {offsets = [1, 0], sizes = [1, 8], strides = [1, 1]} : vector<2x8xf32> to vector<1x8xf32>
    %417 = vector.broadcast %415 : vector<2x1xf32> to vector<2x8xf32>
    %418 = vector.broadcast %416 : vector<1x8xf32> to vector<2x8xf32>
    %419 = arith.mulf %417, %418 : vector<2x8xf32>
    %420 = arith.addf %414, %419 : vector<2x8xf32>
    %421 = arith.negf %420 : vector<2x8xf32>
    %422 = math.exp %421 : vector<2x8xf32>
    %cst_47 = arith.constant 1.000000e+00 : f32
    %423 = vector.broadcast %cst_47 : f32 to vector<2x8xf32>
    %424 = arith.addf %423, %422 : vector<2x8xf32>
    %425 = arith.divf %423, %424 : vector<2x8xf32>
    %426 = math.tanh %420 : vector<2x8xf32>
    %427 = vector.extract_strided_slice %425 {offsets = [0, 0], sizes = [2, 2], strides = [1, 1]} : vector<2x8xf32> to vector<2x2xf32>
    %428 = vector.extract_strided_slice %425 {offsets = [0, 2], sizes = [2, 2], strides = [1, 1]} : vector<2x8xf32> to vector<2x2xf32>
    %429 = vector.extract_strided_slice %426 {offsets = [0, 4], sizes = [2, 2], strides = [1, 1]} : vector<2x8xf32> to vector<2x2xf32>
    %430 = vector.extract_strided_slice %425 {offsets = [0, 6], sizes = [2, 2], strides = [1, 1]} : vector<2x8xf32> to vector<2x2xf32>
    %431 = arith.mulf %428, %394 : vector<2x2xf32>
    %432 = arith.mulf %427, %429 : vector<2x2xf32>
    %433 = arith.addf %431, %432 : vector<2x2xf32>
    %434 = math.tanh %433 : vector<2x2xf32>
    %435 = arith.mulf %430, %434 : vector<2x2xf32>
    %436 = vector.extract_strided_slice %435 {offsets = [0, 0], sizes = [2, 1], strides = [1, 1]} : vector<2x2xf32> to vector<2x1xf32>
    %437 = vector.extract_strided_slice %4 {offsets = [0, 0], sizes = [1, 1], strides = [1, 1]} : vector<1x2xf32> to vector<1x1xf32>
    %438 = vector.broadcast %437 : vector<1x1xf32> to vector<2x1xf32>
    %439 = arith.mulf %436, %438 : vector<2x1xf32>
    %440 = vector.broadcast %5 : vector<1x1xf32> to vector<2x1xf32>
    %441 = arith.addf %440, %439 : vector<2x1xf32>
    %442 = vector.extract_strided_slice %435 {offsets = [0, 1], sizes = [2, 1], strides = [1, 1]} : vector<2x2xf32> to vector<2x1xf32>
    %443 = vector.extract_strided_slice %4 {offsets = [0, 1], sizes = [1, 1], strides = [1, 1]} : vector<1x2xf32> to vector<1x1xf32>
    %444 = vector.broadcast %443 : vector<1x1xf32> to vector<2x1xf32>
    %445 = arith.mulf %442, %444 : vector<2x1xf32>
    %446 = arith.addf %441, %445 : vector<2x1xf32>
    %447 = vector.extract_strided_slice %210 {offsets = [12, 0], sizes = [2, 8], strides = [1, 1]} : vector<16x8xf32> to vector<2x8xf32>
    %448 = vector.extract_strided_slice %435 {offsets = [0, 0], sizes = [2, 1], strides = [1, 1]} : vector<2x2xf32> to vector<2x1xf32>
    %449 = vector.extract_strided_slice %6 {offsets = [0, 0], sizes = [1, 8], strides = [1, 1]} : vector<2x8xf32> to vector<1x8xf32>
    %450 = vector.broadcast %448 : vector<2x1xf32> to vector<2x8xf32>
    %451 = vector.broadcast %449 : vector<1x8xf32> to vector<2x8xf32>
    %452 = arith.mulf %450, %451 : vector<2x8xf32>
    %453 = arith.addf %447, %452 : vector<2x8xf32>
    %454 = vector.extract_strided_slice %435 {offsets = [0, 1], sizes = [2, 1], strides = [1, 1]} : vector<2x2xf32> to vector<2x1xf32>
    %455 = vector.extract_strided_slice %6 {offsets = [1, 0], sizes = [1, 8], strides = [1, 1]} : vector<2x8xf32> to vector<1x8xf32>
    %456 = vector.broadcast %454 : vector<2x1xf32> to vector<2x8xf32>
    %457 = vector.broadcast %455 : vector<1x8xf32> to vector<2x8xf32>
    %458 = arith.mulf %456, %457 : vector<2x8xf32>
    %459 = arith.addf %453, %458 : vector<2x8xf32>
    %460 = arith.negf %459 : vector<2x8xf32>
    %461 = math.exp %460 : vector<2x8xf32>
    %cst_48 = arith.constant 1.000000e+00 : f32
    %462 = vector.broadcast %cst_48 : f32 to vector<2x8xf32>
    %463 = arith.addf %462, %461 : vector<2x8xf32>
    %464 = arith.divf %462, %463 : vector<2x8xf32>
    %465 = math.tanh %459 : vector<2x8xf32>
    %466 = vector.extract_strided_slice %464 {offsets = [0, 0], sizes = [2, 2], strides = [1, 1]} : vector<2x8xf32> to vector<2x2xf32>
    %467 = vector.extract_strided_slice %464 {offsets = [0, 2], sizes = [2, 2], strides = [1, 1]} : vector<2x8xf32> to vector<2x2xf32>
    %468 = vector.extract_strided_slice %465 {offsets = [0, 4], sizes = [2, 2], strides = [1, 1]} : vector<2x8xf32> to vector<2x2xf32>
    %469 = vector.extract_strided_slice %464 {offsets = [0, 6], sizes = [2, 2], strides = [1, 1]} : vector<2x8xf32> to vector<2x2xf32>
    %470 = arith.mulf %467, %433 : vector<2x2xf32>
    %471 = arith.mulf %466, %468 : vector<2x2xf32>
    %472 = arith.addf %470, %471 : vector<2x2xf32>
    %473 = math.tanh %472 : vector<2x2xf32>
    %474 = arith.mulf %469, %473 : vector<2x2xf32>
    %475 = vector.extract_strided_slice %474 {offsets = [0, 0], sizes = [2, 1], strides = [1, 1]} : vector<2x2xf32> to vector<2x1xf32>
    %476 = vector.extract_strided_slice %4 {offsets = [0, 0], sizes = [1, 1], strides = [1, 1]} : vector<1x2xf32> to vector<1x1xf32>
    %477 = vector.broadcast %476 : vector<1x1xf32> to vector<2x1xf32>
    %478 = arith.mulf %475, %477 : vector<2x1xf32>
    %479 = vector.broadcast %5 : vector<1x1xf32> to vector<2x1xf32>
    %480 = arith.addf %479, %478 : vector<2x1xf32>
    %481 = vector.extract_strided_slice %474 {offsets = [0, 1], sizes = [2, 1], strides = [1, 1]} : vector<2x2xf32> to vector<2x1xf32>
    %482 = vector.extract_strided_slice %4 {offsets = [0, 1], sizes = [1, 1], strides = [1, 1]} : vector<1x2xf32> to vector<1x1xf32>
    %483 = vector.broadcast %482 : vector<1x1xf32> to vector<2x1xf32>
    %484 = arith.mulf %481, %483 : vector<2x1xf32>
    %485 = arith.addf %480, %484 : vector<2x1xf32>
    %486 = vector.extract_strided_slice %210 {offsets = [14, 0], sizes = [2, 8], strides = [1, 1]} : vector<16x8xf32> to vector<2x8xf32>
    %487 = vector.extract_strided_slice %474 {offsets = [0, 0], sizes = [2, 1], strides = [1, 1]} : vector<2x2xf32> to vector<2x1xf32>
    %488 = vector.extract_strided_slice %6 {offsets = [0, 0], sizes = [1, 8], strides = [1, 1]} : vector<2x8xf32> to vector<1x8xf32>
    %489 = vector.broadcast %487 : vector<2x1xf32> to vector<2x8xf32>
    %490 = vector.broadcast %488 : vector<1x8xf32> to vector<2x8xf32>
    %491 = arith.mulf %489, %490 : vector<2x8xf32>
    %492 = arith.addf %486, %491 : vector<2x8xf32>
    %493 = vector.extract_strided_slice %474 {offsets = [0, 1], sizes = [2, 1], strides = [1, 1]} : vector<2x2xf32> to vector<2x1xf32>
    %494 = vector.extract_strided_slice %6 {offsets = [1, 0], sizes = [1, 8], strides = [1, 1]} : vector<2x8xf32> to vector<1x8xf32>
    %495 = vector.broadcast %493 : vector<2x1xf32> to vector<2x8xf32>
    %496 = vector.broadcast %494 : vector<1x8xf32> to vector<2x8xf32>
    %497 = arith.mulf %495, %496 : vector<2x8xf32>
    %498 = arith.addf %492, %497 : vector<2x8xf32>
    %499 = arith.negf %498 : vector<2x8xf32>
    %500 = math.exp %499 : vector<2x8xf32>
    %cst_49 = arith.constant 1.000000e+00 : f32
    %501 = vector.broadcast %cst_49 : f32 to vector<2x8xf32>
    %502 = arith.addf %501, %500 : vector<2x8xf32>
    %503 = arith.divf %501, %502 : vector<2x8xf32>
    %504 = math.tanh %498 : vector<2x8xf32>
    %505 = vector.extract_strided_slice %503 {offsets = [0, 0], sizes = [2, 2], strides = [1, 1]} : vector<2x8xf32> to vector<2x2xf32>
    %506 = vector.extract_strided_slice %503 {offsets = [0, 2], sizes = [2, 2], strides = [1, 1]} : vector<2x8xf32> to vector<2x2xf32>
    %507 = vector.extract_strided_slice %504 {offsets = [0, 4], sizes = [2, 2], strides = [1, 1]} : vector<2x8xf32> to vector<2x2xf32>
    %508 = vector.extract_strided_slice %503 {offsets = [0, 6], sizes = [2, 2], strides = [1, 1]} : vector<2x8xf32> to vector<2x2xf32>
    %509 = arith.mulf %506, %472 : vector<2x2xf32>
    %510 = arith.mulf %505, %507 : vector<2x2xf32>
    %511 = arith.addf %509, %510 : vector<2x2xf32>
    %512 = math.tanh %511 : vector<2x2xf32>
    %513 = arith.mulf %508, %512 : vector<2x2xf32>
    %514 = vector.extract_strided_slice %513 {offsets = [0, 0], sizes = [2, 1], strides = [1, 1]} : vector<2x2xf32> to vector<2x1xf32>
    %515 = vector.extract_strided_slice %4 {offsets = [0, 0], sizes = [1, 1], strides = [1, 1]} : vector<1x2xf32> to vector<1x1xf32>
    %516 = vector.broadcast %515 : vector<1x1xf32> to vector<2x1xf32>
    %517 = arith.mulf %514, %516 : vector<2x1xf32>
    %518 = vector.broadcast %5 : vector<1x1xf32> to vector<2x1xf32>
    %519 = arith.addf %518, %517 : vector<2x1xf32>
    %520 = vector.extract_strided_slice %513 {offsets = [0, 1], sizes = [2, 1], strides = [1, 1]} : vector<2x2xf32> to vector<2x1xf32>
    %521 = vector.extract_strided_slice %4 {offsets = [0, 1], sizes = [1, 1], strides = [1, 1]} : vector<1x2xf32> to vector<1x1xf32>
    %522 = vector.broadcast %521 : vector<1x1xf32> to vector<2x1xf32>
    %523 = arith.mulf %520, %522 : vector<2x1xf32>
    %524 = arith.addf %519, %523 : vector<2x1xf32>
    %525 = tpu.concatenate %251, %290, %329, %368, %407, %446, %485, %524 in 1 : vector<2x1xf32>, vector<2x1xf32>, vector<2x1xf32>, vector<2x1xf32>, vector<2x1xf32>, vector<2x1xf32>, vector<2x1xf32>, vector<2x1xf32> -> vector<2x8xf32>
    %c0_50 = arith.constant 0 : index
    %c0_51 = arith.constant 0 : index
    %526 = vector.load %arg4[%c0_50, %c0_51] : memref<2x8xf32, #tpu.memory_space<vmem>>, vector<2x8xf32>
    tpu.vector_store %arg4[%c0_50, %c0_51], %525 {strides = array<i32>} : memref<2x8xf32, #tpu.memory_space<vmem>>, vector<2x8xf32>,
    return
  }
}

</mosaic_0001>

<llo_original>
// kernel: lstm1_forward.1
$region0: #{lstm1_forward.1}
  #allocation0 [shape = 'u32[]', space=smem, size = 0x4, offset = 0x4, fixed_abs, tag = 'smem constant byte address 0x4 - core index']
  #allocation1 [shape = 'u32[72,128]{1,0:T(1,128)}', space=vmem, size = 0x9000, scoped, tag = 'internal scratch']
  %s0 = inlined_call_operand.hbm [shape: f32[2,8,54], index: 0, kind: input, shape index: {}]
  %s1 = inlined_call_operand.hbm [shape: f32[54,128], index: 1, kind: input, shape index: {}]
  %s2 = inlined_call_operand.hbm [shape: bf16[32,128], index: 2, kind: input, shape index: {}]
  %s3 = inlined_call_operand.hbm [shape: f32[40,128], index: 3, kind: input, shape index: {}]
  %s4 = inlined_call_operand.hbm [shape: f32[2,8], index: 4, kind: output, shape index: {}]
  %s5 = sld [smem:[#allocation0]]
  $region42: #{lstm1_forward.1} parent=0
    _
  %s7 = ssub.s32 1, %s5
  %s8 = scalar_select 0, %s7, %s5
  $region1: #{lstm1_forward.1} parent=0
    #allocation2 [shape = 'u8[8192]{0}', space=vmem, size = 0x2000, scoped, tag = 'input window, operand 0, single buffered']
    #allocation3 [shape = 's32[1]{0}', space=sflag, size = 0x4, scoped, tag = 'scoped memory for lstm1_forward.1']
    #allocation4 [shape = 's32[1]{0}', space=sflag, size = 0x4, scoped, tag = 'scoped memory for lstm1_forward.1']
    #allocation5 [shape = 'u8[28672]{0}', space=vmem, size = 0x7000, scoped, tag = 'input window, operand 1, single buffered']
    #allocation6 [shape = 's32[1]{0}', space=sflag, size = 0x4, scoped, tag = 'scoped memory for lstm1_forward.1']
    #allocation7 [shape = 'u8[8192]{0}', space=vmem, size = 0x2000, scoped, tag = 'input window, operand 2, single buffered']
    #allocation8 [shape = 'u8[20480]{0}', space=vmem, size = 0x5000, scoped, tag = 'input window, operand 3, single buffered']
    #allocation9 [shape = 's32[1]{0}', space=sflag, size = 0x4, scoped, tag = 'scoped memory for lstm1_forward.1']
    #allocation10 [shape = 'u8[1024]{0}', space=vmem, size = 0x400, scoped, tag = 'output window, operand 0, single buffered']
    %9 = vsyncpa [#allocation3], 0
    %10 = vsyncpa [#allocation6], 0
    %11 = vsyncpa [#allocation9], 0
    %12 = vsyncpa [#allocation4], 0
    // Predicated region
    $region2: #{lstm1_forward.1} parent=1 // pred_check
      _
    $region3: #{lstm1_forward.1} parent=1 // pred_check_branch
      %14 = sbr.rel (0) target = $region5
    $region4: #{lstm1_forward.1} parent=1 // pred_region
      %16 = vsyncadd [#allocation3], 0
      %s17 = sshll.u32 %s0, 4
      %s18 = int_to_ptr.hbm [resolvable:$true] %s17
      %s19 = sshll.u32 [#allocation2], 4
      %s20 = int_to_ptr.vmem [resolvable:$true] %s19
      %25 = dma.hbm_to_vmem [thread:$0]  %s18, 256, %s20, [#allocation3], 128, 128, 8
    $region5: #{lstm1_forward.1} parent=1 // pred_fallthru
      _
    // Predicated region
    $region6: #{lstm1_forward.1} parent=1 // pred_check
      _
    $region7: #{lstm1_forward.1} parent=1 // pred_check_branch
      %27 = sbr.rel (0) target = $region9
    $region8: #{lstm1_forward.1} parent=1 // pred_region
      %29 = vsyncadd [#allocation6], 0
      %s30 = sshll.u32 %s1, 4
      %s31 = int_to_ptr.hbm [resolvable:$true] %s30
      %s32 = sshll.u32 [#allocation5], 4
      %s33 = int_to_ptr.vmem [resolvable:$true] %s32
      %38 = dma.hbm_to_vmem [thread:$0]  %s31, 896, %s33, [#allocation6], 128, 128, 8
    $region9: #{lstm1_forward.1} parent=1 // pred_fallthru
      _
    // Predicated region
    $region10: #{lstm1_forward.1} parent=1 // pred_check
      _
    $region11: #{lstm1_forward.1} parent=1 // pred_check_branch
      %40 = sbr.rel (0) target = $region13
    $region12: #{lstm1_forward.1} parent=1 // pred_region
      %42 = vsyncadd [#allocation6], 0
      %s43 = sshll.u32 %s2, 4
      %s44 = int_to_ptr.hbm [resolvable:$true] %s43
      %s45 = sshll.u32 [#allocation7], 4
      %s46 = int_to_ptr.vmem [resolvable:$true] %s45
      %51 = dma.hbm_to_vmem [thread:$0]  %s44, 256, %s46, [#allocation6], 64, 64, 4
    $region13: #{lstm1_forward.1} parent=1 // pred_fallthru
      _
    // Predicated region
    $region14: #{lstm1_forward.1} parent=1 // pred_check
      _
    $region15: #{lstm1_forward.1} parent=1 // pred_check_branch
      %53 = sbr.rel (0) target = $region17
    $region16: #{lstm1_forward.1} parent=1 // pred_region
      %55 = vsyncadd [#allocation9], 0
      %s56 = sshll.u32 %s3, 4
      %s57 = int_to_ptr.hbm [resolvable:$true] %s56
      %s58 = sshll.u32 [#allocation8], 4
      %s59 = int_to_ptr.vmem [resolvable:$true] %s58
      %64 = dma.hbm_to_vmem [thread:$0]  %s57, 640, %s59, [#allocation9], 128, 128, 8
    $region17: #{lstm1_forward.1} parent=1 // pred_fallthru
      _
    // Predicated region
    $region18: #{lstm1_forward.1} parent=1 // pred_check
      _
    $region19: #{lstm1_forward.1} parent=1 // pred_check_branch
      %66 = sbr.rel (0) target = $region21
    $region20: #{lstm1_forward.1} parent=1 // pred_region
      %68 = dma.done [#allocation3], 256
    $region21: #{lstm1_forward.1} parent=1 // pred_fallthru
      _
    // Predicated region
    $region22: #{lstm1_forward.1} parent=1 // pred_check
      _
    $region23: #{lstm1_forward.1} parent=1 // pred_check_branch
      %70 = sbr.rel (0) target = $region25
    $region24: #{lstm1_forward.1} parent=1 // pred_region
      %72 = dma.done [#allocation6], 896
    $region25: #{lstm1_forward.1} parent=1 // pred_fallthru
      _
    // Predicated region
    $region26: #{lstm1_forward.1} parent=1 // pred_check
      _
    $region27: #{lstm1_forward.1} parent=1 // pred_check_branch
      %74 = sbr.rel (0) target = $region29
    $region28: #{lstm1_forward.1} parent=1 // pred_region
      %76 = dma.done [#allocation6], 256
    $region29: #{lstm1_forward.1} parent=1 // pred_fallthru
      _
    // Predicated region
    $region30: #{lstm1_forward.1} parent=1 // pred_check
      _
    $region31: #{lstm1_forward.1} parent=1 // pred_check_branch
      %78 = sbr.rel (0) target = $region33
    $region32: #{lstm1_forward.1} parent=1 // pred_region
      %80 = dma.done [#allocation9], 640
    $region33: #{lstm1_forward.1} parent=1 // pred_fallthru
      _
    %v82 = vld [vmem:[#allocation7] sm:$0xf]
    %v83 = vld [vmem:[#allocation7 + $0x4] sm:$0xf]
    %v84 = vld [vmem:[#allocation7 + $0x8] sm:$0xf]
    %v85 = vld [vmem:[#allocation7 + $0xc] sm:$0xf]
    %v86 = vld [vmem:[#allocation8] sm:$0xff]
    %v87 = vld [vmem:[#allocation8 + $0x8] sm:$0xff]
    %v88 = vld [vmem:[#allocation8 + $0x10] sm:$0xff]
    %v89 = vld [vmem:[#allocation8 + $0x18] sm:$0xff]
    %v90 = vld [vmem:[#allocation8 + $0x20] sm:$0xff]
    %v91 = vld [vmem:[#allocation2] sm:$0xff]
    %v92 = vld [vmem:[#allocation5] sm:$0xff]
    %v93 = vld [vmem:[#allocation5 + $0x8] sm:$0xff]
    %v94 = vld [vmem:[#allocation5 + $0x10] sm:$0xff]
    %v95 = vld [vmem:[#allocation5 + $0x18] sm:$0xff]
    %v96 = vld [vmem:[#allocation5 + $0x20] sm:$0xff]
    %v97 = vld [vmem:[#allocation5 + $0x28] sm:$0xff]
    %v98 = vld [vmem:[#allocation5 + $0x30] sm:$0x3f]
    %v99 = vperm.slane %v86, 0
    %vm100 = vcmask 441344
    %v102 = vsel %vm100, %v91, 0
    %vm104 = vcmask 1045504
    %v106 = vsel %vm104, %v98, 0
    %108 = vmatpush.msra.mxu0 0.0
    %109 = vmatpush.msra.mxu0 0.0
    %110 = vmatpush.msra.mxu0 0.0
    %111 = vmatpush.msra.mxu0 0.0
    %112 = vmatpush.msra.mxu0 0.0
    %113 = vmatpush.msra.mxu0 0.0
    %114 = vmatpush.msra.mxu0 0.0
    %115 = vmatpush.msra.mxu0 0.0
    %116 = vmatpush.msra.mxu0 0.0
    %117 = vmatpush.msra.mxu0 %v106
    %118 = vmatpush.msra.mxu0 %v97
    %119 = vmatpush.msra.mxu0 %v96
    %120 = vmatpush.msra.mxu0 %v95
    %121 = vmatpush.msra.mxu0 %v94
    %122 = vmatpush.msra.mxu0 %v93
    %123 = vmatpush.msra.mxu0 %v92
    %124 = vmatmul.f32.gmra.mxu0 %v102
    %v125 = vpop.f32.mrf.mxu0
    %v126 = vadd.f32 %v99, %v125
    %127 = vdwg.mxu0
    %s128 = scalar_lea.vmem [#allocation2], 8
    %v129 = vld [vmem:[%s128] sm:$0xff]
    %v131 = vsel %vm100, %v129, 0
    %133 = vmatpush.msra.mxu0 0.0
    %134 = vmatpush.msra.mxu0 0.0
    %135 = vmatpush.msra.mxu0 0.0
    %136 = vmatpush.msra.mxu0 0.0
    %137 = vmatpush.msra.mxu0 0.0
    %138 = vmatpush.msra.mxu0 0.0
    %139 = vmatpush.msra.mxu0 0.0
    %140 = vmatpush.msra.mxu0 0.0
    %141 = vmatpush.msra.mxu0 0.0
    %142 = vmatpush.msra.mxu0 %v106
    %143 = vmatpush.msra.mxu0 %v97
    %144 = vmatpush.msra.mxu0 %v96
    %145 = vmatpush.msra.mxu0 %v95
    %146 = vmatpush.msra.mxu0 %v94
    %147 = vmatpush.msra.mxu0 %v93
    %148 = vmatpush.msra.mxu0 %v92
    %149 = vmatmul.f32.gmra.mxu0 %v131
    %v150 = vpop.f32.mrf.mxu0
    %v151 = vadd.f32 %v99, %v150
    %152 = vdwg.mxu0
    %v154 = vrot.slane %v151, 7
    %vm156 = vcmask 1040384
    %v157 = vsel %vm156, %v126, %v154
    %v159 = vrot.slane %v126, 1
    %v161 = vsel %vm156, %v159, %v151
    %v162 = vrot.slane %v126, 2
    %v164 = vrot.slane %v151, 1
    %v166 = vsel %vm156, %v162, %v164
    %v167 = vrot.slane %v126, 3
    %v169 = vrot.slane %v151, 2
    %v171 = vsel %vm156, %v167, %v169
    %v172 = vrot.slane %v126, 4
    %v174 = vrot.slane %v151, 3
    %v176 = vsel %vm156, %v172, %v174
    %v177 = vrot.slane %v126, 5
    %v179 = vrot.slane %v151, 4
    %v181 = vsel %vm156, %v177, %v179
    %v182 = vrot.slane %v126, 6
    %v184 = vrot.slane %v151, 5
    %v186 = vsel %vm156, %v182, %v184
    %v187 = vrot.slane %v126, 7
    %v189 = vrot.slane %v151, 6
    %v191 = vsel %vm156, %v187, %v189
    %v196 = vunpack.c.l.b16 %v82
    %v197 = vunpack.c.l.b16 %v83
    %v198 = vunpack.c.l.b16 %v84
    %v199 = vunpack.c.l.b16 %v85
    %v200 = vpack.c.b16 %v197, %v196
    %v201 = vpack.c.b16 %v199, %v198
    %vm204 = vcmask 261120
    %v206 = vsel %vm204, 0, 0
    %208 = vmatpush.bf16.msra.mxu0 0
    %209 = vmatpush.bf16.msra.mxu0 0
    %210 = vmatpush.bf16.msra.mxu0 0
    %211 = vmatpush.bf16.msra.mxu0 0
    %212 = vmatpush.bf16.msra.mxu0 0
    %213 = vmatpush.bf16.msra.mxu0 0
    %214 = vmatpush.bf16.msra.mxu0 %v201
    %215 = vmatpush.bf16.msra.mxu0 %v200
    %216 = vmatmul.bf16.gmra.mxu0 %v206
    %v217 = vpop.f32.mrf.mxu0
    %v218 = vadd.f32 0.0, %v217
    %v219 = vpop.f32.mrf.mxu0
    %220 = vdwg.mxu0
    %v221 = vadd.f32 %v157, %v218
    %v222 = vxor.u32 %v221, 2147483648
    %v223 = vmul.f32 %v222, 1.442695
    %v224 = vpow.pop %v223
    %v225 = vadd.f32 %v224, 1.0
    %v226 = vrcp.pop %v225
    %v227 = vmul.f32 %v225, %v226
    %v228 = vsub.f32 1.0, %v227
    %v229 = vmul.f32 %v226, %v228
    %v230 = vadd.f32 %v226, %v229
    %vm231 = vweird.f32 %v225
    %vm232 = vweird.f32 %v226
    %vm233 = vmor %vm231, %vm232
    %v234 = vsel %vm233, %v226, %v230
    %v235 = vand.u32 2147483647, %v225
    %vm236 = vcmp.eq.f32.partialorder %v235, 8.507059e+37
    %v237 = vand.u32 %v225, 2147483648
    %v238 = vor.u32 1.1754944e-38, %v237
    %v239 = vsel %vm236, %v238, %v234
    %v240 = vmul.f32 1.0, %v239
    %v241 = vtanh.pop %v221
    %v242 = vmul.f32 %v240, 0.0
    %244 = vrot.lane.b32.xlu0 %v241, 64
    %v245 = vpop.permute.xlu0 %244
    %v247 = vmul.f32 %v240, %v245
    %249 = vrot.lane.b32.xlu0 %v247, 32
    %v250 = vpop.permute.xlu0 %249
    %v252 = vadd.f32 %v242, %v250
    %v253 = vtanh.pop %v252
    %255 = vrot.lane.b32.xlu0 %v253, 64
    %v256 = vpop.permute.xlu0 %255
    %v258 = vmul.f32 %v240, %v256
    %v259 = vmax.f32 %v258, 0.0
    %v260 = vpack.c.bf16 %v258, %v258
    %262 = vrot.lane.b32.xlu0 %v260, 32
    %v263 = vpop.permute.xlu0 %262
    %v265 = vsel %vm204, %v263, 0
    %267 = vmatpush.bf16.msra.mxu0 0
    %268 = vmatpush.bf16.msra.mxu0 0
    %269 = vmatpush.bf16.msra.mxu0 0
    %270 = vmatpush.bf16.msra.mxu0 0
    %271 = vmatpush.bf16.msra.mxu0 0
    %272 = vmatpush.bf16.msra.mxu0 0
    %273 = vmatpush.bf16.msra.mxu0 %v201
    %274 = vmatpush.bf16.msra.mxu0 %v200
    %275 = vmatmul.bf16.gmra.mxu0 %v265
    %v276 = vpop.f32.mrf.mxu0
    %v277 = vadd.f32 0.0, %v276
    %v278 = vpop.f32.mrf.mxu0
    %279 = vdwg.mxu0
    %v280 = vadd.f32 %v161, %v277
    %v281 = vxor.u32 %v280, 2147483648
    %v282 = vmul.f32 %v281, 1.442695
    %v283 = vpow.pop %v282
    %v284 = vadd.f32 %v283, 1.0
    %v285 = vrcp.pop %v284
    %v286 = vmul.f32 %v284, %v285
    %v287 = vsub.f32 1.0, %v286
    %v288 = vmul.f32 %v285, %v287
    %v289 = vadd.f32 %v285, %v288
    %vm290 = vweird.f32 %v284
    %vm291 = vweird.f32 %v285
    %vm292 = vmor %vm290, %vm291
    %v293 = vsel %vm292, %v285, %v289
    %v294 = vand.u32 2147483647, %v284
    %vm295 = vcmp.eq.f32.partialorder %v294, 8.507059e+37
    %v296 = vand.u32 %v284, 2147483648
    %v297 = vor.u32 1.1754944e-38, %v296
    %v298 = vsel %vm295, %v297, %v293
    %v299 = vmul.f32 1.0, %v298
    %v300 = vtanh.pop %v280
    %v301 = vmul.f32 %v299, %v252
    %303 = vrot.lane.b32.xlu0 %v300, 64
    %v304 = vpop.permute.xlu0 %303
    %v306 = vmul.f32 %v299, %v304
    %308 = vrot.lane.b32.xlu0 %v306, 32
    %v309 = vpop.permute.xlu0 %308
    %v311 = vadd.f32 %v301, %v309
    %v312 = vtanh.pop %v311
    %314 = vrot.lane.b32.xlu0 %v312, 64
    %v315 = vpop.permute.xlu0 %314
    %v317 = vmul.f32 %v299, %v315
    %v318 = vmax.f32 %v317, 0.0
    %v319 = vpack.c.bf16 %v317, %v317
    %321 = vrot.lane.b32.xlu0 %v319, 32
    %v322 = vpop.permute.xlu0 %321
    %v324 = vsel %vm204, %v322, 0
    %326 = vmatpush.bf16.msra.mxu0 0
    %327 = vmatpush.bf16.msra.mxu0 0
    %328 = vmatpush.bf16.msra.mxu0 0
    %329 = vmatpush.bf16.msra.mxu0 0
    %330 = vmatpush.bf16.msra.mxu0 0
    %331 = vmatpush.bf16.msra.mxu0 0
    %332 = vmatpush.bf16.msra.mxu0 %v201
    %333 = vmatpush.bf16.msra.mxu0 %v200
    %334 = vmatmul.bf16.gmra.mxu0 %v324
    %v335 = vpop.f32.mrf.mxu0
    %v336 = vadd.f32 0.0, %v335
    %v337 = vpop.f32.mrf.mxu0
    %338 = vdwg.mxu0
    %v339 = vadd.f32 %v166, %v336
    %v340 = vxor.u32 %v339, 2147483648
    %v341 = vmul.f32 %v340, 1.442695
    %v342 = vpow.pop %v341
    %v343 = vadd.f32 %v342, 1.0
    %v344 = vrcp.pop %v343
    %v345 = vmul.f32 %v343, %v344
    %v346 = vsub.f32 1.0, %v345
    %v347 = vmul.f32 %v344, %v346
    %v348 = vadd.f32 %v344, %v347
    %vm349 = vweird.f32 %v343
    %vm350 = vweird.f32 %v344
    %vm351 = vmor %vm349, %vm350
    %v352 = vsel %vm351, %v344, %v348
    %v353 = vand.u32 2147483647, %v343
    %vm354 = vcmp.eq.f32.partialorder %v353, 8.507059e+37
    %v355 = vand.u32 %v343, 2147483648
    %v356 = vor.u32 1.1754944e-38, %v355
    %v357 = vsel %vm354, %v356, %v352
    %v358 = vmul.f32 1.0, %v357
    %v359 = vtanh.pop %v339
    %v360 = vmul.f32 %v358, %v311
    %362 = vrot.lane.b32.xlu0 %v359, 64
    %v363 = vpop.permute.xlu0 %362
    %v365 = vmul.f32 %v358, %v363
    %367 = vrot.lane.b32.xlu0 %v365, 32
    %v368 = vpop.permute.xlu0 %367
    %v370 = vadd.f32 %v360, %v368
    %v371 = vtanh.pop %v370
    %373 = vrot.lane.b32.xlu0 %v371, 64
    %v374 = vpop.permute.xlu0 %373
    %v376 = vmul.f32 %v358, %v374
    %v377 = vmax.f32 %v376, 0.0
    %v378 = vpack.c.bf16 %v376, %v376
    %380 = vrot.lane.b32.xlu0 %v378, 32
    %v381 = vpop.permute.xlu0 %380
    %v383 = vsel %vm204, %v381, 0
    %385 = vmatpush.bf16.msra.mxu0 0
    %386 = vmatpush.bf16.msra.mxu0 0
    %387 = vmatpush.bf16.msra.mxu0 0
    %388 = vmatpush.bf16.msra.mxu0 0
    %389 = vmatpush.bf16.msra.mxu0 0
    %390 = vmatpush.bf16.msra.mxu0 0
    %391 = vmatpush.bf16.msra.mxu0 %v201
    %392 = vmatpush.bf16.msra.mxu0 %v200
    %393 = vmatmul.bf16.gmra.mxu0 %v383
    %v394 = vpop.f32.mrf.mxu0
    %v395 = vadd.f32 0.0, %v394
    %v396 = vpop.f32.mrf.mxu0
    %397 = vdwg.mxu0
    %v398 = vadd.f32 %v171, %v395
    %v399 = vxor.u32 %v398, 2147483648
    %v400 = vmul.f32 %v399, 1.442695
    %v401 = vpow.pop %v400
    %v402 = vadd.f32 %v401, 1.0
    %v403 = vrcp.pop %v402
    %v404 = vmul.f32 %v402, %v403
    %v405 = vsub.f32 1.0, %v404
    %v406 = vmul.f32 %v403, %v405
    %v407 = vadd.f32 %v403, %v406
    %vm408 = vweird.f32 %v402
    %vm409 = vweird.f32 %v403
    %vm410 = vmor %vm408, %vm409
    %v411 = vsel %vm410, %v403, %v407
    %v412 = vand.u32 2147483647, %v402
    %vm413 = vcmp.eq.f32.partialorder %v412, 8.507059e+37
    %v414 = vand.u32 %v402, 2147483648
    %v415 = vor.u32 1.1754944e-38, %v414
    %v416 = vsel %vm413, %v415, %v411
    %v417 = vmul.f32 1.0, %v416
    %v418 = vtanh.pop %v398
    %v419 = vmul.f32 %v417, %v370
    %421 = vrot.lane.b32.xlu0 %v418, 64
    %v422 = vpop.permute.xlu0 %421
    %v424 = vmul.f32 %v417, %v422
    %426 = vrot.lane.b32.xlu0 %v424, 32
    %v427 = vpop.permute.xlu0 %426
    %v429 = vadd.f32 %v419, %v427
    %v430 = vtanh.pop %v429
    %432 = vrot.lane.b32.xlu0 %v430, 64
    %v433 = vpop.permute.xlu0 %432
    %v435 = vmul.f32 %v417, %v433
    %v436 = vmax.f32 %v435, 0.0
    %v437 = vpack.c.bf16 %v435, %v435
    %439 = vrot.lane.b32.xlu0 %v437, 32
    %v440 = vpop.permute.xlu0 %439
    %v442 = vsel %vm204, %v440, 0
    %444 = vmatpush.bf16.msra.mxu0 0
    %445 = vmatpush.bf16.msra.mxu0 0
    %446 = vmatpush.bf16.msra.mxu0 0
    %447 = vmatpush.bf16.msra.mxu0 0
    %448 = vmatpush.bf16.msra.mxu0 0
    %449 = vmatpush.bf16.msra.mxu0 0
    %450 = vmatpush.bf16.msra.mxu0 %v201
    %451 = vmatpush.bf16.msra.mxu0 %v200
    %452 = vmatmul.bf16.gmra.mxu0 %v442
    %v453 = vpop.f32.mrf.mxu0
    %v454 = vadd.f32 0.0, %v453
    %v455 = vpop.f32.mrf.mxu0
    %456 = vdwg.mxu0
    %v457 = vadd.f32 %v176, %v454
    %v458 = vxor.u32 %v457, 2147483648
    %v459 = vmul.f32 %v458, 1.442695
    %v460 = vpow.pop %v459
    %v461 = vadd.f32 %v460, 1.0
    %v462 = vrcp.pop %v461
    %v463 = vmul.f32 %v461, %v462
    %v464 = vsub.f32 1.0, %v463
    %v465 = vmul.f32 %v462, %v464
    %v466 = vadd.f32 %v462, %v465
    %vm467 = vweird.f32 %v461
    %vm468 = vweird.f32 %v462
    %vm469 = vmor %vm467, %vm468
    %v470 = vsel %vm469, %v462, %v466
    %v471 = vand.u32 2147483647, %v461
    %vm472 = vcmp.eq.f32.partialorder %v471, 8.507059e+37
    %v473 = vand.u32 %v461, 2147483648
    %v474 = vor.u32 1.1754944e-38, %v473
    %v475 = vsel %vm472, %v474, %v470
    %v476 = vmul.f32 1.0, %v475
    %v477 = vtanh.pop %v457
    %v478 = vmul.f32 %v476, %v429
    %480 = vrot.lane.b32.xlu0 %v477, 64
    %v481 = vpop.permute.xlu0 %480
    %v483 = vmul.f32 %v476, %v481
    %485 = vrot.lane.b32.xlu0 %v483, 32
    %v486 = vpop.permute.xlu0 %485
    %v488 = vadd.f32 %v478, %v486
    %v489 = vtanh.pop %v488
    %491 = vrot.lane.b32.xlu0 %v489, 64
    %v492 = vpop.permute.xlu0 %491
    %v494 = vmul.f32 %v476, %v492
    %v495 = vmax.f32 %v494, 0.0
    %v496 = vpack.c.bf16 %v494, %v494
    %498 = vrot.lane.b32.xlu0 %v496, 32
    %v499 = vpop.permute.xlu0 %498
    %v501 = vsel %vm204, %v499, 0
    %503 = vmatpush.bf16.msra.mxu0 0
    %504 = vmatpush.bf16.msra.mxu0 0
    %505 = vmatpush.bf16.msra.mxu0 0
    %506 = vmatpush.bf16.msra.mxu0 0
    %507 = vmatpush.bf16.msra.mxu0 0
    %508 = vmatpush.bf16.msra.mxu0 0
    %509 = vmatpush.bf16.msra.mxu0 %v201
    %510 = vmatpush.bf16.msra.mxu0 %v200
    %511 = vmatmul.bf16.gmra.mxu0 %v501
    %v512 = vpop.f32.mrf.mxu0
    %v513 = vadd.f32 0.0, %v512
    %v514 = vpop.f32.mrf.mxu0
    %515 = vdwg.mxu0
    %v516 = vadd.f32 %v181, %v513
    %v517 = vxor.u32 %v516, 2147483648
    %v518 = vmul.f32 %v517, 1.442695
    %v519 = vpow.pop %v518
    %v520 = vadd.f32 %v519, 1.0
    %v521 = vrcp.pop %v520
    %v522 = vmul.f32 %v520, %v521
    %v523 = vsub.f32 1.0, %v522
    %v524 = vmul.f32 %v521, %v523
    %v525 = vadd.f32 %v521, %v524
    %vm526 = vweird.f32 %v520
    %vm527 = vweird.f32 %v521
    %vm528 = vmor %vm526, %vm527
    %v529 = vsel %vm528, %v521, %v525
    %v530 = vand.u32 2147483647, %v520
    %vm531 = vcmp.eq.f32.partialorder %v530, 8.507059e+37
    %v532 = vand.u32 %v520, 2147483648
    %v533 = vor.u32 1.1754944e-38, %v532
    %v534 = vsel %vm531, %v533, %v529
    %v535 = vmul.f32 1.0, %v534
    %v536 = vtanh.pop %v516
    %v537 = vmul.f32 %v535, %v488
    %539 = vrot.lane.b32.xlu0 %v536, 64
    %v540 = vpop.permute.xlu0 %539
    %v542 = vmul.f32 %v535, %v540
    %544 = vrot.lane.b32.xlu0 %v542, 32
    %v545 = vpop.permute.xlu0 %544
    %v547 = vadd.f32 %v537, %v545
    %v548 = vtanh.pop %v547
    %550 = vrot.lane.b32.xlu0 %v548, 64
    %v551 = vpop.permute.xlu0 %550
    %v553 = vmul.f32 %v535, %v551
    %v554 = vmax.f32 %v553, 0.0
    %v555 = vpack.c.bf16 %v553, %v553
    %557 = vrot.lane.b32.xlu0 %v555, 32
    %v558 = vpop.permute.xlu0 %557
    %v560 = vsel %vm204, %v558, 0
    %562 = vmatpush.bf16.msra.mxu0 0
    %563 = vmatpush.bf16.msra.mxu0 0
    %564 = vmatpush.bf16.msra.mxu0 0
    %565 = vmatpush.bf16.msra.mxu0 0
    %566 = vmatpush.bf16.msra.mxu0 0
    %567 = vmatpush.bf16.msra.mxu0 0
    %568 = vmatpush.bf16.msra.mxu0 %v201
    %569 = vmatpush.bf16.msra.mxu0 %v200
    %570 = vmatmul.bf16.gmra.mxu0 %v560
    %v571 = vpop.f32.mrf.mxu0
    %v572 = vadd.f32 0.0, %v571
    %v573 = vpop.f32.mrf.mxu0
    %574 = vdwg.mxu0
    %v575 = vadd.f32 %v186, %v572
    %v576 = vxor.u32 %v575, 2147483648
    %v577 = vmul.f32 %v576, 1.442695
    %v578 = vpow.pop %v577
    %v579 = vadd.f32 %v578, 1.0
    %v580 = vrcp.pop %v579
    %v581 = vmul.f32 %v579, %v580
    %v582 = vsub.f32 1.0, %v581
    %v583 = vmul.f32 %v580, %v582
    %v584 = vadd.f32 %v580, %v583
    %vm585 = vweird.f32 %v579
    %vm586 = vweird.f32 %v580
    %vm587 = vmor %vm585, %vm586
    %v588 = vsel %vm587, %v580, %v584
    %v589 = vand.u32 2147483647, %v579
    %vm590 = vcmp.eq.f32.partialorder %v589, 8.507059e+37
    %v591 = vand.u32 %v579, 2147483648
    %v592 = vor.u32 1.1754944e-38, %v591
    %v593 = vsel %vm590, %v592, %v588
    %v594 = vmul.f32 1.0, %v593
    %v595 = vtanh.pop %v575
    %v596 = vmul.f32 %v594, %v547
    %598 = vrot.lane.b32.xlu0 %v595, 64
    %v599 = vpop.permute.xlu0 %598
    %v601 = vmul.f32 %v594, %v599
    %603 = vrot.lane.b32.xlu0 %v601, 32
    %v604 = vpop.permute.xlu0 %603
    %v606 = vadd.f32 %v596, %v604
    %v607 = vtanh.pop %v606
    %609 = vrot.lane.b32.xlu0 %v607, 64
    %v610 = vpop.permute.xlu0 %609
    %v612 = vmul.f32 %v594, %v610
    %v613 = vmax.f32 %v612, 0.0
    %v614 = vpack.c.bf16 %v612, %v612
    %616 = vrot.lane.b32.xlu0 %v614, 32
    %v617 = vpop.permute.xlu0 %616
    %v619 = vsel %vm204, %v617, 0
    %621 = vmatpush.bf16.msra.mxu0 0
    %622 = vmatpush.bf16.msra.mxu0 0
    %623 = vmatpush.bf16.msra.mxu0 0
    %624 = vmatpush.bf16.msra.mxu0 0
    %625 = vmatpush.bf16.msra.mxu0 0
    %626 = vmatpush.bf16.msra.mxu0 0
    %627 = vmatpush.bf16.msra.mxu0 %v201
    %628 = vmatpush.bf16.msra.mxu0 %v200
    %629 = vmatmul.bf16.gmra.mxu0 %v619
    %v630 = vpop.f32.mrf.mxu0
    %v631 = vadd.f32 0.0, %v630
    %v632 = vpop.f32.mrf.mxu0
    %633 = vdwg.mxu0
    %v634 = vadd.f32 %v191, %v631
    %v635 = vxor.u32 %v634, 2147483648
    %v636 = vmul.f32 %v635, 1.442695
    %v637 = vpow.pop %v636
    %v638 = vadd.f32 %v637, 1.0
    %v639 = vrcp.pop %v638
    %v640 = vmul.f32 %v638, %v639
    %v641 = vsub.f32 1.0, %v640
    %v642 = vmul.f32 %v639, %v641
    %v643 = vadd.f32 %v639, %v642
    %vm644 = vweird.f32 %v638
    %vm645 = vweird.f32 %v639
    %vm646 = vmor %vm644, %vm645
    %v647 = vsel %vm646, %v639, %v643
    %v648 = vand.u32 2147483647, %v638
    %vm649 = vcmp.eq.f32.partialorder %v648, 8.507059e+37
    %v650 = vand.u32 %v638, 2147483648
    %v651 = vor.u32 1.1754944e-38, %v650
    %v652 = vsel %vm649, %v651, %v647
    %v653 = vmul.f32 1.0, %v652
    %v654 = vtanh.pop %v634
    %v655 = vmul.f32 %v653, %v606
    %657 = vrot.lane.b32.xlu0 %v654, 64
    %v658 = vpop.permute.xlu0 %657
    %v660 = vmul.f32 %v653, %v658
    %662 = vrot.lane.b32.xlu0 %v660, 32
    %v663 = vpop.permute.xlu0 %662
    %v665 = vadd.f32 %v655, %v663
    %v666 = vtanh.pop %v665
    %668 = vrot.lane.b32.xlu0 %v666, 64
    %v669 = vpop.permute.xlu0 %668
    %v671 = vmul.f32 %v653, %v669
    %v672 = vmax.f32 %v671, 0.0
    %v674 = vrot.slane %v318, 6
    %v677 = vrot.slane %v377, 4
    %v680 = vrot.slane %v436, 2
    %v683 = vrot.slane %v554, 6
    %v686 = vrot.slane %v613, 4
    %v689 = vrot.slane %v672, 2
    %vm691 = vcmask 1041408
    %v692 = vsel %vm691, %v259, %v674
    %vm693 = vcmask 1043456
    %v694 = vsel %vm693, %v692, %v677
    %v695 = vsel %vm104, %v694, %v680
    %v696 = vsel %vm691, %v495, %v683
    %v697 = vsel %vm693, %v696, %v686
    %v698 = vsel %vm104, %v697, %v689
    %701 = vrot.lane.b32.xlu0 %v695, 32
    %v702 = vpop.permute.xlu0 %701
    %703 = vrot.lane.b32.xlu0 %v698, 32
    %v704 = vpop.permute.xlu0 %703
    %v705 = vsel %vm204, %v702, 0
    %v707 = vsel %vm204, %v704, 0
    %709 = vmatpush.msra.mxu0 0.0
    %710 = vmatpush.msra.mxu0 0.0
    %711 = vmatpush.msra.mxu0 0.0
    %712 = vmatpush.msra.mxu0 0.0
    %713 = vmatpush.msra.mxu0 0.0
    %714 = vmatpush.msra.mxu0 0.0
    %715 = vmatpush.msra.mxu0 0.0
    %716 = vmatpush.msra.mxu0 0.0
    %717 = vmatpush.msra.mxu0 0.0
    %718 = vmatpush.msra.mxu0 0.0
    %719 = vmatpush.msra.mxu0 0.0
    %720 = vmatpush.msra.mxu0 0.0
    %721 = vmatpush.msra.mxu0 %v90
    %722 = vmatpush.msra.mxu0 %v89
    %723 = vmatpush.msra.mxu0 %v88
    %724 = vmatpush.msra.mxu0 %v87
    %725 = vmatmul.f32.gmra.mxu0 %v705
    %v726 = vpop.f32.mrf.mxu0
    %v727 = vadd.f32 0.0, %v726
    %728 = vmatmul.f32.gmra.mxu0 %v707
    %v729 = vpop.f32.mrf.mxu0
    %v730 = vadd.f32 0.0, %v729
    %731 = vdwg.mxu0
    %v732 = vperm.slane %v86, 1
    %v733 = vadd.f32 %v727, %v732
    %v734 = vadd.f32 %v730, %v732
    %v735 = vperm.slane %v86, 2
    %v736 = vmul.f32 %v735, 0.0
    %v737 = vadd.f32 %v733, %v736
    %v738 = vperm.slane %v86, 3
    %v739 = vmul.f32 %v738, 0.0
    %v740 = vadd.f32 %v737, %v739
    %v741 = vxor.u32 %v740, 2147483648
    %v742 = vmul.f32 %v741, 1.442695
    %v743 = vpow.pop %v742
    %v744 = vadd.f32 %v743, 1.0
    %v745 = vrcp.pop %v744
    %v746 = vmul.f32 %v744, %v745
    %v747 = vsub.f32 1.0, %v746
    %v748 = vmul.f32 %v745, %v747
    %v749 = vadd.f32 %v745, %v748
    %vm750 = vweird.f32 %v744
    %vm751 = vweird.f32 %v745
    %vm752 = vmor %vm750, %vm751
    %v753 = vsel %vm752, %v745, %v749
    %v754 = vand.u32 2147483647, %v744
    %vm755 = vcmp.eq.f32.partialorder %v754, 8.507059e+37
    %v756 = vand.u32 %v744, 2147483648
    %v757 = vor.u32 1.1754944e-38, %v756
    %v758 = vsel %vm755, %v757, %v753
    %v759 = vmul.f32 1.0, %v758
    %v760 = vtanh.pop %v740
    %v761 = vmul.f32 %v759, 0.0
    %763 = vrot.lane.b32.xlu0 %v760, 124
    %v764 = vpop.permute.xlu0 %763
    %v766 = vmul.f32 %v759, %v764
    %768 = vrot.lane.b32.xlu0 %v766, 2
    %v769 = vpop.permute.xlu0 %768
    %v771 = vadd.f32 %v761, %v769
    %v772 = vtanh.pop %v771
    %774 = vrot.lane.b32.xlu0 %v772, 4
    %v775 = vpop.permute.xlu0 %774
    %v777 = vmul.f32 %v759, %v775
    %779 = vrot.lane.b32.xlu0 %v732, 126
    %v780 = vpop.permute.xlu0 %779
    %v782 = vmul.f32 %v777, %v780
    %784 = vrot.lane.b32.xlu0 %v782, 4
    %v785 = vpop.permute.xlu0 %784
    %v787 = vadd.f32 %v732, %v785
    %788 = vrot.lane.b32.xlu0 %v782, 3
    %v789 = vpop.permute.xlu0 %788
    %v791 = vadd.f32 %v787, %v789
    %793 = vset.pattern.permute.xlu0 6
    %794 = vperm.xlu0 %793, %v777
    %v795 = vpop.permute.xlu0 %794
    %v797 = vmul.f32 %v795, %v735
    %v799 = vrot.slane %v797, 6
    %v801 = vadd.f32 %v733, %v799
    %802 = vset.pattern.permute.xlu0 7
    %803 = vperm.xlu0 %802, %v777
    %v804 = vpop.permute.xlu0 %803
    %v806 = vmul.f32 %v804, %v738
    %v808 = vrot.slane %v806, 6
    %v810 = vadd.f32 %v801, %v808
    %v811 = vxor.u32 %v810, 2147483648
    %v812 = vmul.f32 %v811, 1.442695
    %v813 = vpow.pop %v812
    %v814 = vadd.f32 %v813, 1.0
    %v815 = vrcp.pop %v814
    %v816 = vmul.f32 %v814, %v815
    %v817 = vsub.f32 1.0, %v816
    %v818 = vmul.f32 %v815, %v817
    %v819 = vadd.f32 %v815, %v818
    %vm820 = vweird.f32 %v814
    %vm821 = vweird.f32 %v815
    %vm822 = vmor %vm820, %vm821
    %v823 = vsel %vm822, %v815, %v819
    %v824 = vand.u32 2147483647, %v814
    %vm825 = vcmp.eq.f32.partialorder %v824, 8.507059e+37
    %v826 = vand.u32 %v814, 2147483648
    %v827 = vor.u32 1.1754944e-38, %v826
    %v828 = vsel %vm825, %v827, %v823
    %v829 = vmul.f32 1.0, %v828
    %v830 = vtanh.pop %v810
    %v832 = vrot.slane %v771, 6
    %v834 = vmul.f32 %v829, %v832
    %836 = vrot.lane.b32.xlu0 %v830, 124
    %v837 = vpop.permute.xlu0 %836
    %v839 = vmul.f32 %v829, %v837
    %841 = vrot.lane.b32.xlu0 %v839, 2
    %v842 = vpop.permute.xlu0 %841
    %v844 = vadd.f32 %v834, %v842
    %v845 = vtanh.pop %v844
    %847 = vrot.lane.b32.xlu0 %v845, 4
    %v848 = vpop.permute.xlu0 %847
    %v850 = vmul.f32 %v829, %v848
    %v851 = vmul.f32 %v850, %v780
    %v853 = vrot.slane %v851, 2
    %854 = vrot.lane.b32.xlu0 %v853, 4
    %v855 = vpop.permute.xlu0 %854
    %v857 = vadd.f32 %v732, %v855
    %858 = vrot.lane.b32.xlu0 %v853, 3
    %v859 = vpop.permute.xlu0 %858
    %v861 = vadd.f32 %v857, %v859
    %863 = vset.pattern.permute.xlu0 6
    %864 = vperm.xlu0 %863, %v850
    %v865 = vpop.permute.xlu0 %864
    %v867 = vmul.f32 %v865, %v735
    %v869 = vrot.slane %v867, 6
    %v871 = vadd.f32 %v733, %v869
    %872 = vset.pattern.permute.xlu0 7
    %873 = vperm.xlu0 %872, %v850
    %v874 = vpop.permute.xlu0 %873
    %v876 = vmul.f32 %v874, %v738
    %v878 = vrot.slane %v876, 6
    %v880 = vadd.f32 %v871, %v878
    %v881 = vxor.u32 %v880, 2147483648
    %v882 = vmul.f32 %v881, 1.442695
    %v883 = vpow.pop %v882
    %v884 = vadd.f32 %v883, 1.0
    %v885 = vrcp.pop %v884
    %v886 = vmul.f32 %v884, %v885
    %v887 = vsub.f32 1.0, %v886
    %v888 = vmul.f32 %v885, %v887
    %v889 = vadd.f32 %v885, %v888
    %vm890 = vweird.f32 %v884
    %vm891 = vweird.f32 %v885
    %vm892 = vmor %vm890, %vm891
    %v893 = vsel %vm892, %v885, %v889
    %v894 = vand.u32 2147483647, %v884
    %vm895 = vcmp.eq.f32.partialorder %v894, 8.507059e+37
    %v896 = vand.u32 %v884, 2147483648
    %v897 = vor.u32 1.1754944e-38, %v896
    %v898 = vsel %vm895, %v897, %v893
    %v899 = vmul.f32 1.0, %v898
    %v900 = vtanh.pop %v880
    %v902 = vrot.slane %v844, 6
    %v904 = vmul.f32 %v899, %v902
    %906 = vrot.lane.b32.xlu0 %v900, 124
    %v907 = vpop.permute.xlu0 %906
    %v909 = vmul.f32 %v899, %v907
    %911 = vrot.lane.b32.xlu0 %v909, 2
    %v912 = vpop.permute.xlu0 %911
    %v914 = vadd.f32 %v904, %v912
    %v915 = vtanh.pop %v914
    %917 = vrot.lane.b32.xlu0 %v915, 4
    %v918 = vpop.permute.xlu0 %917
    %v920 = vmul.f32 %v899, %v918
    %v921 = vmul.f32 %v920, %v780
    %v923 = vrot.slane %v921, 4
    %924 = vrot.lane.b32.xlu0 %v923, 4
    %v925 = vpop.permute.xlu0 %924
    %v927 = vadd.f32 %v732, %v925
    %928 = vrot.lane.b32.xlu0 %v923, 3
    %v929 = vpop.permute.xlu0 %928
    %v931 = vadd.f32 %v927, %v929
    %933 = vset.pattern.permute.xlu0 6
    %934 = vperm.xlu0 %933, %v920
    %v935 = vpop.permute.xlu0 %934
    %v937 = vmul.f32 %v935, %v735
    %v939 = vrot.slane %v937, 6
    %v941 = vadd.f32 %v733, %v939
    %942 = vset.pattern.permute.xlu0 7
    %943 = vperm.xlu0 %942, %v920
    %v944 = vpop.permute.xlu0 %943
    %v946 = vmul.f32 %v944, %v738
    %v948 = vrot.slane %v946, 6
    %v950 = vadd.f32 %v941, %v948
    %v951 = vxor.u32 %v950, 2147483648
    %v952 = vmul.f32 %v951, 1.442695
    %v953 = vpow.pop %v952
    %v954 = vadd.f32 %v953, 1.0
    %v955 = vrcp.pop %v954
    %v956 = vmul.f32 %v954, %v955
    %v957 = vsub.f32 1.0, %v956
    %v958 = vmul.f32 %v955, %v957
    %v959 = vadd.f32 %v955, %v958
    %vm960 = vweird.f32 %v954
    %vm961 = vweird.f32 %v955
    %vm962 = vmor %vm960, %vm961
    %v963 = vsel %vm962, %v955, %v959
    %v964 = vand.u32 2147483647, %v954
    %vm965 = vcmp.eq.f32.partialorder %v964, 8.507059e+37
    %v966 = vand.u32 %v954, 2147483648
    %v967 = vor.u32 1.1754944e-38, %v966
    %v968 = vsel %vm965, %v967, %v963
    %v969 = vmul.f32 1.0, %v968
    %v970 = vtanh.pop %v950
    %v972 = vrot.slane %v914, 6
    %v974 = vmul.f32 %v969, %v972
    %976 = vrot.lane.b32.xlu0 %v970, 124
    %v977 = vpop.permute.xlu0 %976
    %v979 = vmul.f32 %v969, %v977
    %981 = vrot.lane.b32.xlu0 %v979, 2
    %v982 = vpop.permute.xlu0 %981
    %v984 = vadd.f32 %v974, %v982
    %v985 = vtanh.pop %v984
    %987 = vrot.lane.b32.xlu0 %v985, 4
    %v988 = vpop.permute.xlu0 %987
    %v990 = vmul.f32 %v969, %v988
    %v991 = vmul.f32 %v990, %v780
    %v993 = vrot.slane %v991, 6
    %994 = vrot.lane.b32.xlu0 %v993, 4
    %v995 = vpop.permute.xlu0 %994
    %v997 = vadd.f32 %v732, %v995
    %998 = vrot.lane.b32.xlu0 %v993, 3
    %v999 = vpop.permute.xlu0 %998
    %v1001 = vadd.f32 %v997, %v999
    %1003 = vset.pattern.permute.xlu0 6
    %1004 = vperm.xlu0 %1003, %v990
    %v1005 = vpop.permute.xlu0 %1004
    %v1007 = vmul.f32 %v1005, %v735
    %v1009 = vrot.slane %v1007, 6
    %v1011 = vadd.f32 %v734, %v1009
    %1012 = vset.pattern.permute.xlu0 7
    %1013 = vperm.xlu0 %1012, %v990
    %v1014 = vpop.permute.xlu0 %1013
    %v1016 = vmul.f32 %v1014, %v738
    %v1018 = vrot.slane %v1016, 6
    %v1020 = vadd.f32 %v1011, %v1018
    %v1021 = vxor.u32 %v1020, 2147483648
    %v1022 = vmul.f32 %v1021, 1.442695
    %v1023 = vpow.pop %v1022
    %v1024 = vadd.f32 %v1023, 1.0
    %v1025 = vrcp.pop %v1024
    %v1026 = vmul.f32 %v1024, %v1025
    %v1027 = vsub.f32 1.0, %v1026
    %v1028 = vmul.f32 %v1025, %v1027
    %v1029 = vadd.f32 %v1025, %v1028
    %vm1030 = vweird.f32 %v1024
    %vm1031 = vweird.f32 %v1025
    %vm1032 = vmor %vm1030, %vm1031
    %v1033 = vsel %vm1032, %v1025, %v1029
    %v1034 = vand.u32 2147483647, %v1024
    %vm1035 = vcmp.eq.f32.partialorder %v1034, 8.507059e+37
    %v1036 = vand.u32 %v1024, 2147483648
    %v1037 = vor.u32 1.1754944e-38, %v1036
    %v1038 = vsel %vm1035, %v1037, %v1033
    %v1039 = vmul.f32 1.0, %v1038
    %v1040 = vtanh.pop %v1020
    %v1042 = vrot.slane %v984, 6
    %v1044 = vmul.f32 %v1039, %v1042
    %1046 = vrot.lane.b32.xlu0 %v1040, 124
    %v1047 = vpop.permute.xlu0 %1046
    %v1049 = vmul.f32 %v1039, %v1047
    %1051 = vrot.lane.b32.xlu0 %v1049, 2
    %v1052 = vpop.permute.xlu0 %1051
    %v1054 = vadd.f32 %v1044, %v1052
    %v1055 = vtanh.pop %v1054
    %1057 = vrot.lane.b32.xlu0 %v1055, 4
    %v1058 = vpop.permute.xlu0 %1057
    %v1060 = vmul.f32 %v1039, %v1058
    %v1061 = vmul.f32 %v1060, %v780
    %1063 = vrot.lane.b32.xlu0 %v1061, 4
    %v1064 = vpop.permute.xlu0 %1063
    %v1066 = vadd.f32 %v732, %v1064
    %1067 = vrot.lane.b32.xlu0 %v1061, 3
    %v1068 = vpop.permute.xlu0 %1067
    %v1070 = vadd.f32 %v1066, %v1068
    %1072 = vset.pattern.permute.xlu0 6
    %1073 = vperm.xlu0 %1072, %v1060
    %v1074 = vpop.permute.xlu0 %1073
    %v1076 = vmul.f32 %v1074, %v735
    %v1078 = vrot.slane %v1076, 6
    %v1080 = vadd.f32 %v734, %v1078
    %1081 = vset.pattern.permute.xlu0 7
    %1082 = vperm.xlu0 %1081, %v1060
    %v1083 = vpop.permute.xlu0 %1082
    %v1085 = vmul.f32 %v1083, %v738
    %v1087 = vrot.slane %v1085, 6
    %v1089 = vadd.f32 %v1080, %v1087
    %v1090 = vxor.u32 %v1089, 2147483648
    %v1091 = vmul.f32 %v1090, 1.442695
    %v1092 = vpow.pop %v1091
    %v1093 = vadd.f32 %v1092, 1.0
    %v1094 = vrcp.pop %v1093
    %v1095 = vmul.f32 %v1093, %v1094
    %v1096 = vsub.f32 1.0, %v1095
    %v1097 = vmul.f32 %v1094, %v1096
    %v1098 = vadd.f32 %v1094, %v1097
    %vm1099 = vweird.f32 %v1093
    %vm1100 = vweird.f32 %v1094
    %vm1101 = vmor %vm1099, %vm1100
    %v1102 = vsel %vm1101, %v1094, %v1098
    %v1103 = vand.u32 2147483647, %v1093
    %vm1104 = vcmp.eq.f32.partialorder %v1103, 8.507059e+37
    %v1105 = vand.u32 %v1093, 2147483648
    %v1106 = vor.u32 1.1754944e-38, %v1105
    %v1107 = vsel %vm1104, %v1106, %v1102
    %v1108 = vmul.f32 1.0, %v1107
    %v1109 = vtanh.pop %v1089
    %v1111 = vrot.slane %v1054, 6
    %v1113 = vmul.f32 %v1108, %v1111
    %1115 = vrot.lane.b32.xlu0 %v1109, 124
    %v1116 = vpop.permute.xlu0 %1115
    %v1118 = vmul.f32 %v1108, %v1116
    %1120 = vrot.lane.b32.xlu0 %v1118, 2
    %v1121 = vpop.permute.xlu0 %1120
    %v1123 = vadd.f32 %v1113, %v1121
    %v1124 = vtanh.pop %v1123
    %1126 = vrot.lane.b32.xlu0 %v1124, 4
    %v1127 = vpop.permute.xlu0 %1126
    %v1129 = vmul.f32 %v1108, %v1127
    %v1130 = vmul.f32 %v1129, %v780
    %v1132 = vrot.slane %v1130, 2
    %1133 = vrot.lane.b32.xlu0 %v1132, 4
    %v1134 = vpop.permute.xlu0 %1133
    %v1136 = vadd.f32 %v732, %v1134
    %1137 = vrot.lane.b32.xlu0 %v1132, 3
    %v1138 = vpop.permute.xlu0 %1137
    %v1140 = vadd.f32 %v1136, %v1138
    %1142 = vset.pattern.permute.xlu0 6
    %1143 = vperm.xlu0 %1142, %v1129
    %v1144 = vpop.permute.xlu0 %1143
    %v1146 = vmul.f32 %v1144, %v735
    %v1148 = vrot.slane %v1146, 6
    %v1150 = vadd.f32 %v734, %v1148
    %1151 = vset.pattern.permute.xlu0 7
    %1152 = vperm.xlu0 %1151, %v1129
    %v1153 = vpop.permute.xlu0 %1152
    %v1155 = vmul.f32 %v1153, %v738
    %v1157 = vrot.slane %v1155, 6
    %v1159 = vadd.f32 %v1150, %v1157
    %v1160 = vxor.u32 %v1159, 2147483648
    %v1161 = vmul.f32 %v1160, 1.442695
    %v1162 = vpow.pop %v1161
    %v1163 = vadd.f32 %v1162, 1.0
    %v1164 = vrcp.pop %v1163
    %v1165 = vmul.f32 %v1163, %v1164
    %v1166 = vsub.f32 1.0, %v1165
    %v1167 = vmul.f32 %v1164, %v1166
    %v1168 = vadd.f32 %v1164, %v1167
    %vm1169 = vweird.f32 %v1163
    %vm1170 = vweird.f32 %v1164
    %vm1171 = vmor %vm1169, %vm1170
    %v1172 = vsel %vm1171, %v1164, %v1168
    %v1173 = vand.u32 2147483647, %v1163
    %vm1174 = vcmp.eq.f32.partialorder %v1173, 8.507059e+37
    %v1175 = vand.u32 %v1163, 2147483648
    %v1176 = vor.u32 1.1754944e-38, %v1175
    %v1177 = vsel %vm1174, %v1176, %v1172
    %v1178 = vmul.f32 1.0, %v1177
    %v1179 = vtanh.pop %v1159
    %v1181 = vrot.slane %v1123, 6
    %v1183 = vmul.f32 %v1178, %v1181
    %1185 = vrot.lane.b32.xlu0 %v1179, 124
    %v1186 = vpop.permute.xlu0 %1185
    %v1188 = vmul.f32 %v1178, %v1186
    %1190 = vrot.lane.b32.xlu0 %v1188, 2
    %v1191 = vpop.permute.xlu0 %1190
    %v1193 = vadd.f32 %v1183, %v1191
    %v1194 = vtanh.pop %v1193
    %1196 = vrot.lane.b32.xlu0 %v1194, 4
    %v1197 = vpop.permute.xlu0 %1196
    %v1199 = vmul.f32 %v1178, %v1197
    %v1200 = vmul.f32 %v1199, %v780
    %v1202 = vrot.slane %v1200, 4
    %1203 = vrot.lane.b32.xlu0 %v1202, 4
    %v1204 = vpop.permute.xlu0 %1203
    %v1206 = vadd.f32 %v732, %v1204
    %1207 = vrot.lane.b32.xlu0 %v1202, 3
    %v1208 = vpop.permute.xlu0 %1207
    %v1210 = vadd.f32 %v1206, %v1208
    %1212 = vset.pattern.permute.xlu0 6
    %1213 = vperm.xlu0 %1212, %v1199
    %v1214 = vpop.permute.xlu0 %1213
    %v1216 = vmul.f32 %v1214, %v735
    %v1218 = vrot.slane %v1216, 6
    %v1220 = vadd.f32 %v734, %v1218
    %1221 = vset.pattern.permute.xlu0 7
    %1222 = vperm.xlu0 %1221, %v1199
    %v1223 = vpop.permute.xlu0 %1222
    %v1225 = vmul.f32 %v1223, %v738
    %v1227 = vrot.slane %v1225, 6
    %v1229 = vadd.f32 %v1220, %v1227
    %v1230 = vxor.u32 %v1229, 2147483648
    %v1231 = vmul.f32 %v1230, 1.442695
    %v1232 = vpow.pop %v1231
    %v1233 = vadd.f32 %v1232, 1.0
    %v1234 = vrcp.pop %v1233
    %v1235 = vmul.f32 %v1233, %v1234
    %v1236 = vsub.f32 1.0, %v1235
    %v1237 = vmul.f32 %v1234, %v1236
    %v1238 = vadd.f32 %v1234, %v1237
    %vm1239 = vweird.f32 %v1233
    %vm1240 = vweird.f32 %v1234
    %vm1241 = vmor %vm1239, %vm1240
    %v1242 = vsel %vm1241, %v1234, %v1238
    %v1243 = vand.u32 2147483647, %v1233
    %vm1244 = vcmp.eq.f32.partialorder %v1243, 8.507059e+37
    %v1245 = vand.u32 %v1233, 2147483648
    %v1246 = vor.u32 1.1754944e-38, %v1245
    %v1247 = vsel %vm1244, %v1246, %v1242
    %v1248 = vmul.f32 1.0, %v1247
    %v1249 = vtanh.pop %v1229
    %v1251 = vrot.slane %v1193, 6
    %v1253 = vmul.f32 %v1248, %v1251
    %1255 = vrot.lane.b32.xlu0 %v1249, 124
    %v1256 = vpop.permute.xlu0 %1255
    %v1258 = vmul.f32 %v1248, %v1256
    %1260 = vrot.lane.b32.xlu0 %v1258, 2
    %v1261 = vpop.permute.xlu0 %1260
    %v1263 = vadd.f32 %v1253, %v1261
    %v1264 = vtanh.pop %v1263
    %1266 = vrot.lane.b32.xlu0 %v1264, 4
    %v1267 = vpop.permute.xlu0 %1266
    %v1269 = vmul.f32 %v1248, %v1267
    %v1270 = vmul.f32 %v1269, %v780
    %v1272 = vrot.slane %v1270, 6
    %1273 = vrot.lane.b32.xlu0 %v1272, 4
    %v1274 = vpop.permute.xlu0 %1273
    %v1276 = vadd.f32 %v732, %v1274
    %1277 = vrot.lane.b32.xlu0 %v1272, 3
    %v1278 = vpop.permute.xlu0 %1277
    %v1280 = vadd.f32 %v1276, %v1278
    %1282 = vrot.lane.b32.xlu0 %v791, 118
    %v1283 = vpop.permute.xlu0 %1282
    %1286 = vrot.lane.b32.xlu0 %v861, 119
    %v1287 = vpop.permute.xlu0 %1286
    %1290 = vrot.lane.b32.xlu0 %v931, 120
    %v1291 = vpop.permute.xlu0 %1290
    %1294 = vrot.lane.b32.xlu0 %v1001, 121
    %v1295 = vpop.permute.xlu0 %1294
    %1298 = vrot.lane.b32.xlu0 %v1070, 122
    %v1299 = vpop.permute.xlu0 %1298
    %1302 = vrot.lane.b32.xlu0 %v1140, 123
    %v1303 = vpop.permute.xlu0 %1302
    %1306 = vrot.lane.b32.xlu0 %v1210, 124
    %v1307 = vpop.permute.xlu0 %1306
    %1310 = vrot.lane.b32.xlu0 %v1280, 125
    %v1311 = vpop.permute.xlu0 %1310
    %vm1313 = vcmask 7168
    %v1314 = vsel %vm1313, %v1283, %v1287
    %vm1315 = vcmask 15360
    %v1316 = vsel %vm1315, %v1314, %v1291
    %vm1317 = vcmask 23552
    %v1318 = vsel %vm1317, %v1316, %v1295
    %vm1319 = vcmask 31744
    %v1320 = vsel %vm1319, %v1318, %v1299
    %vm1321 = vcmask 39936
    %v1322 = vsel %vm1321, %v1320, %v1303
    %vm1323 = vcmask 48128
    %v1324 = vsel %vm1323, %v1322, %v1307
    %vm1325 = vcmask 56320
    %v1326 = vsel %vm1325, %v1324, %v1311
    %vm1327 = vcmask 58368
    %1328 = vst.msk [vmem:[#allocation10] sm:$0x3] %vm1327, %v1326
    // Predicated region
    $region34: #{lstm1_forward.1} parent=1 // pred_check
      _
    $region35: #{lstm1_forward.1} parent=1 // pred_check_branch
      %1330 = sbr.rel (0) target = $region37
    $region36: #{lstm1_forward.1} parent=1 // pred_region
      %1332 = vsyncadd [#allocation4], 0
      %s1334 = sshll.u32 [#allocation10], 4
      %s1335 = int_to_ptr.vmem [resolvable:$true] %s1334
      %s1336 = sshll.u32 %s4, 4
      %s1337 = int_to_ptr.hbm [resolvable:$true] %s1336
      %1339 = dma.vmem_to_hbm [thread:$0]  %s1335, 32, %s1337, [#allocation4]
    $region37: #{lstm1_forward.1} parent=1 // pred_fallthru
      _
    // Predicated region
    $region38: #{lstm1_forward.1} parent=1 // pred_check
      _
    $region39: #{lstm1_forward.1} parent=1 // pred_check_branch
      %1341 = sbr.rel (0) target = $region41
    $region40: #{lstm1_forward.1} parent=1 // pred_region
      %1343 = dma.done [#allocation4], 32
    $region41: #{lstm1_forward.1} parent=1 // pred_fallthru
      _
    %1344 = vsyncpa [#allocation3], 1
    %1345 = vsyncpa [#allocation6], 1
    %1346 = vsyncpa [#allocation9], 1
    %1347 = vsyncpa [#allocation4], 1

</llo_original>
